<compile_context>
chip_gen: v7x
topology: tpu7x:2x2x1
jax: 0.10.0
libtpu: 0.0.40
codegen_flags: <defaults>
</compile_context>

<pallas_src>
import math

import jax
import jax.numpy as jnp
from jax.experimental import pallas as pl
from jax.experimental.pallas import tpu as pltpu


def _pe_table_kernel(inv_freq_ref, phase_ref, o_ref):
    """Compute one (row_tile, d_pad) block of the sinusoidal PE table.

    inv_freq_ref: (1, d_pad) per-column frequency exp(-2k * ln(10000)/d_model)
    phase_ref:    (1, d_pad) per-column phase (0 for even cols, pi/2 for odd cols)
    """
    tl, d = o_ref.shape
    base = pl.program_id(0) * tl  # first absolute row (position) of this block

    pos = (base + jax.lax.broadcasted_iota(jnp.int32, (tl, d), 0)).astype(jnp.float32)

    # Broadcast the (1, d) per-column constants over the (tl, d) tile.
    angle = pos * inv_freq_ref[...] + phase_ref[...]

    # Single transcendental per element: cos(x) == sin(x + pi/2).
    o_ref[...] = jnp.sin(angle)


def build_pe_table_pallas(max_len, d_model, *, row_tile=1024):
    """Build the full (1, max_len, d_model) positional-embedding buffer on TPU."""
    assert d_model % 2 == 0, "d_model must be even (matches the PyTorch module)"

    # Lane-dense output: pad d_model up to a multiple of 128 (min 128).
    d_pad = max(128, ((d_model + 127) // 128) * 128)

    # Fixed row tile (sublane axis), padded grid — no giant untiled fallback.
    rows_pad = ((max_len + 7) // 8) * 8
    tile = min(row_tile, rows_pad)
    rows_pad = ((rows_pad + tile - 1) // tile) * tile  # make tile divide rows_pad
    grid = (rows_pad // tile,)

    # Tiny one-time per-column constants (hoists exp + parity math out of the kernel).
    col = jnp.arange(d_pad, dtype=jnp.int32)
    two_k = ((col // 2) * 2).astype(jnp.float32)                       # 2k for cols 2k, 2k+1
    inv_freq = jnp.exp(two_k * (-math.log(10000.0) / d_model))[None]   # (1, d_pad)
    phase = jnp.where((col & 1) == 1,
                      jnp.float32(math.pi / 2.0),
                      jnp.float32(0.0))[None]                          # (1, d_pad)

    pe = pl.pallas_call(
        _pe_table_kernel,
        out_shape=jax.ShapeDtypeStruct((rows_pad, d_pad), jnp.float32),
        grid=grid,
        in_specs=[
            pl.BlockSpec((1, d_pad), lambda i: (0, 0)),   # inv_freq (same block every step)
            pl.BlockSpec((1, d_pad), lambda i: (0, 0)),   # phase
        ],
        out_specs=pl.BlockSpec((tile, d_pad), lambda i: (i, 0)),
        compiler_params=pltpu.CompilerParams(dimension_semantics=("parallel",)),
    )(inv_freq, phase)

    # Slice off row/lane padding and add the leading batch dim.
    return pe[:max_len, :d_model][None]


class PositionalEmbeddingPallas:
    """JAX/Pallas port of PositionalEmbedding."""

    def __init__(self, d_model, max_len=128):
        self.d_model = d_model
        self.max_len = max_len
        # register_buffer equivalent: computed once, on device, by the Pallas kernel.
        self.pe = build_pe_table_pallas(max_len, d_model)

    def __call__(self, length):
        # forward(length): pe[:, :length] — pure slice of the cached buffer,
        # exactly like the PyTorch forward (no compute in the call path).
        return self.pe[:, :length]


def _reference_pe(max_len, d_model):
    """Plain-JAX reference, mirroring the PyTorch buffer construction."""
    position = jnp.arange(max_len, dtype=jnp.float32)[:, None]
    div_term = jnp.exp(
        jnp.arange(0, d_model, 2, dtype=jnp.float32) * (-math.log(10000.0) / d_model))
    pe = jnp.zeros((max_len, d_model), jnp.float32)
    pe = pe.at[:, 0::2].set(jnp.sin(position * div_term))
    pe = pe.at[:, 1::2].set(jnp.cos(position * div_term))
    return pe[None]


if __name__ == "__main__":
    _ = jax.random.PRNGKey(0)  # module is deterministic; key kept for harness parity

    d_model, max_len, length = 128, 128, 16
    model = PositionalEmbeddingPallas(d_model, max_len=max_len)
    jax.block_until_ready(model.pe)

    out = model(length)
    jax.block_until_ready(out)

    ref = _reference_pe(max_len, d_model)
    assert out.shape == (1, length, d_model)
    assert jnp.allclose(out, ref[:, :length], atol=2e-4, rtol=1e-4), "sliced PE mismatch"
    assert jnp.allclose(model.pe, ref, atol=2e-4, rtol=1e-4), "full PE buffer mismatch"

    print("KERNEL_OK")
</pallas_src>

<mosaic_0001>
module attributes {stable_mosaic.version = 11 : i64} {
  func.func @_pe_table_kernel(%arg0: i32, %arg1: memref<1x128xf32, #tpu.memory_space<vmem>>, %arg2: memref<1x128xf32, #tpu.memory_space<vmem>>, %arg3: memref<128x128xf32, #tpu.memory_space<vmem>>) attributes {dimension_semantics = [#tpu.dimension_semantics<parallel>], iteration_bounds = array<i64: 1>, scalar_prefetch = 0 : i64, scratch_operands = 0 : i64, tpu.core_type = #tpu.core_type<tc>, window_params = [{pipeline_mode = #tpu.pipeline_mode<synchronous>, transform_indices = @transform_0, window_bounds = array<i64: 1, 128>}, {pipeline_mode = #tpu.pipeline_mode<synchronous>, transform_indices = @transform_1, window_bounds = array<i64: 1, 128>}, {transform_indices = @transform_2, window_bounds = array<i64: 128, 128>}]} {
    %c128_i32 = arith.constant 128 : i32
    %0 = arith.muli %arg0, %c128_i32 : i32
    %1 = tpu.iota {dimensions = array<i32: 0>} : vector<128x128xi32>
    %2 = vector.broadcast %0 : i32 to vector<128x128xi32>
    %3 = arith.addi %2, %1 : vector<128x128xi32>
    %4 = arith.sitofp %3 : vector<128x128xi32> to vector<128x128xf32>
    %c0 = arith.constant 0 : index
    %c0_0 = arith.constant 0 : index
    %5 = vector.load %arg1[%c0, %c0_0] : memref<1x128xf32, #tpu.memory_space<vmem>>, vector<1x128xf32>
    %6 = vector.broadcast %5 : vector<1x128xf32> to vector<128x128xf32>
    %7 = arith.mulf %4, %6 : vector<128x128xf32>
    %c0_1 = arith.constant 0 : index
    %c0_2 = arith.constant 0 : index
    %8 = vector.load %arg2[%c0_1, %c0_2] : memref<1x128xf32, #tpu.memory_space<vmem>>, vector<1x128xf32>
    %9 = vector.broadcast %8 : vector<1x128xf32> to vector<128x128xf32>
    %10 = arith.addf %7, %9 : vector<128x128xf32>
    %11 = math.sin %10 : vector<128x128xf32>
    %c0_3 = arith.constant 0 : index
    %c0_4 = arith.constant 0 : index
    %12 = vector.load %arg3[%c0_3, %c0_4] : memref<128x128xf32, #tpu.memory_space<vmem>>, vector<128x128xf32>
    tpu.vector_store %arg3[%c0_3, %c0_4], %11 {strides = array<i32>} : memref<128x128xf32, #tpu.memory_space<vmem>>, vector<128x128xf32>,
    return
  }
  func.func @transform_0(%arg0: i32) -> (i32, i32) {
    %c0_i32 = arith.constant 0 : i32
    %c0_i32_0 = arith.constant 0 : i32
    %c0_i32_1 = arith.constant 0 : i32
    return %c0_i32, %c0_i32_0 : i32, i32
  }
  func.func @transform_1(%arg0: i32) -> (i32, i32) {
    %c0_i32 = arith.constant 0 : i32
    %c0_i32_0 = arith.constant 0 : i32
    %c0_i32_1 = arith.constant 0 : i32
    return %c0_i32, %c0_i32_0 : i32, i32
  }
  func.func @transform_2(%arg0: i32) -> (i32, i32) {
    %c0_i32 = arith.constant 0 : i32
    %c0_i32_0 = arith.constant 0 : i32
    return %arg0, %c0_i32 : i32, i32
  }
}

</mosaic_0001>

<llo_original>
// kernel: tpu_custom_call.1
$region0: #{tpu_custom_call.1}
  #allocation0 [shape = 'u32[]', space=smem, size = 0x4, offset = 0x4, fixed_abs, tag = 'smem constant byte address 0x4 - core index']
  #allocation1 [shape = 'u32[144,128]{1,0:T(1,128)}', space=vmem, size = 0x12000, scoped, tag = 'internal scratch']
  %s0 = inlined_call_operand.hbm [shape: f32[1,128], index: 0, kind: input, shape index: {}]
  %s1 = inlined_call_operand.vmem [shape: f32[1,128], index: 1, kind: input, shape index: {}]
  %s2 = inlined_call_operand.hbm [shape: f32[128,128], index: 2, kind: output, shape index: {}]
  %s3 = sld [smem:[#allocation0]]
  $region22: #{tpu_custom_call.1} parent=0
    _
  %s5 = ssub.s32 1, %s3
  %s6 = scalar_select 0, %s5, %s3
  $region1: #{tpu_custom_call.1} parent=0
    #allocation2 [shape = 'u8[512]{0}', space=vmem, size = 0x400, scoped, tag = 'input window, operand 0, single buffered']
    #allocation3 [shape = 's32[1]{0}', space=sflag, size = 0x4, scoped, tag = 'scoped memory for tpu_custom_call.1']
    #allocation4 [shape = 's32[1]{0}', space=sflag, size = 0x4, scoped, tag = 'scoped memory for tpu_custom_call.1']
    #allocation5 [shape = 'u8[65536]{0}', space=vmem, size = 0x10000, scoped, tag = 'output window, operand 0, single buffered']
    %7 = vsyncpa [#allocation3], 0
    %8 = vsyncpa [#allocation4], 0
    // Predicated region
    $region2: #{tpu_custom_call.1} parent=1 // pred_check
      _
    $region3: #{tpu_custom_call.1} parent=1 // pred_check_branch
      %10 = sbr.rel (0) target = $region5
    $region4: #{tpu_custom_call.1} parent=1 // pred_region
      %s12 = ssub.s32 16, 16
      %13 = vsyncadd [#allocation3], %s12
      %s15 = sshll.u32 [#allocation2], 4
      %s16 = int_to_ptr.vmem [resolvable:$true] %s15
      %18 = dma.hbm_to_vmem [thread:$0]  %s0, 16, %s16, [#allocation3]
    $region5: #{tpu_custom_call.1} parent=1 // pred_fallthru
      _
    // Predicated region
    $region6: #{tpu_custom_call.1} parent=1 // pred_check
      _
    $region7: #{tpu_custom_call.1} parent=1 // pred_check_branch
      %20 = sbr.rel (0) target = $region9
    $region8: #{tpu_custom_call.1} parent=1 // pred_region
      _
    $region9: #{tpu_custom_call.1} parent=1 // pred_fallthru
      _
    // Predicated region
    $region10: #{tpu_custom_call.1} parent=1 // pred_check
      _
    $region11: #{tpu_custom_call.1} parent=1 // pred_check_branch
      %22 = sbr.rel (0) target = $region13
    $region12: #{tpu_custom_call.1} parent=1 // pred_region
      %23 = dma.done [#allocation3], 16
    $region13: #{tpu_custom_call.1} parent=1 // pred_fallthru
      _
    %s24 = smul.u32 0, 128
    %v25 = vlaneseq
    %v26 = vshrl.u32 %v25, 7
    %v27 = vadd.s32 %v26, 8
    %v28 = vadd.s32 %v26, 16
    %v29 = vadd.s32 %v26, 24
    %v30 = vadd.s32 %v26, 32
    %v31 = vadd.s32 %v26, 40
    %v32 = vadd.s32 %v26, 48
    %v33 = vadd.s32 %v26, 56
    %v34 = vadd.s32 %v26, 64
    %v35 = vadd.s32 %v26, 72
    %v36 = vadd.s32 %v26, 80
    %v37 = vadd.s32 %v26, 88
    %v38 = vadd.s32 %v26, 96
    %v39 = vadd.s32 %v26, 104
    %v40 = vadd.s32 %v26, 112
    %v41 = vadd.s32 %v26, 120
    %v42 = vstv %s24
    %v43 = vadd.s32 %v42, %v26
    %v44 = vadd.s32 %v42, %v27
    %v45 = vadd.s32 %v42, %v28
    %v46 = vadd.s32 %v42, %v29
    %v47 = vadd.s32 %v42, %v30
    %v48 = vadd.s32 %v42, %v31
    %v49 = vadd.s32 %v42, %v32
    %v50 = vadd.s32 %v42, %v33
    %v51 = vadd.s32 %v42, %v34
    %v52 = vadd.s32 %v42, %v35
    %v53 = vadd.s32 %v42, %v36
    %v54 = vadd.s32 %v42, %v37
    %v55 = vadd.s32 %v42, %v38
    %v56 = vadd.s32 %v42, %v39
    %v57 = vadd.s32 %v42, %v40
    %v58 = vadd.s32 %v42, %v41
    %v59 = vcvt.s32.f32 %v43
    %v60 = vcvt.s32.f32 %v44
    %v61 = vcvt.s32.f32 %v45
    %v62 = vcvt.s32.f32 %v46
    %v63 = vcvt.s32.f32 %v47
    %v64 = vcvt.s32.f32 %v48
    %v65 = vcvt.s32.f32 %v49
    %v66 = vcvt.s32.f32 %v50
    %v67 = vcvt.s32.f32 %v51
    %v68 = vcvt.s32.f32 %v52
    %v69 = vcvt.s32.f32 %v53
    %v70 = vcvt.s32.f32 %v54
    %v71 = vcvt.s32.f32 %v55
    %v72 = vcvt.s32.f32 %v56
    %v73 = vcvt.s32.f32 %v57
    %v74 = vcvt.s32.f32 %v58
    %v75 = vld [vmem:[#allocation2] sm:$0x1]
    %v77 = vlaneseq
    %v78 = vshrl.u32 %v77, 7
    %v79 = vsub.s32 0, %v78
    %v80 = vrot.slane %v75, %v79
    %v82 = vmul.f32 %v59, %v80
    %v83 = vmul.f32 %v60, %v80
    %v84 = vmul.f32 %v61, %v80
    %v85 = vmul.f32 %v62, %v80
    %v86 = vmul.f32 %v63, %v80
    %v87 = vmul.f32 %v64, %v80
    %v88 = vmul.f32 %v65, %v80
    %v89 = vmul.f32 %v66, %v80
    %v90 = vmul.f32 %v67, %v80
    %v91 = vmul.f32 %v68, %v80
    %v92 = vmul.f32 %v69, %v80
    %v93 = vmul.f32 %v70, %v80
    %v94 = vmul.f32 %v71, %v80
    %v95 = vmul.f32 %v72, %v80
    %v96 = vmul.f32 %v73, %v80
    %v97 = vmul.f32 %v74, %v80
    %v98 = vld [vmem:[%s1] sm:$0x1]
    %v100 = vlaneseq
    %v101 = vshrl.u32 %v100, 7
    %v102 = vsub.s32 0, %v101
    %v103 = vrot.slane %v98, %v102
    %v105 = vadd.f32 %v82, %v103
    %v106 = vadd.f32 %v83, %v103
    %v107 = vadd.f32 %v84, %v103
    %v108 = vadd.f32 %v85, %v103
    %v109 = vadd.f32 %v86, %v103
    %v110 = vadd.f32 %v87, %v103
    %v111 = vadd.f32 %v88, %v103
    %v112 = vadd.f32 %v89, %v103
    %v113 = vadd.f32 %v90, %v103
    %v114 = vadd.f32 %v91, %v103
    %v115 = vadd.f32 %v92, %v103
    %v116 = vadd.f32 %v93, %v103
    %v117 = vadd.f32 %v94, %v103
    %v118 = vadd.f32 %v95, %v103
    %v119 = vadd.f32 %v96, %v103
    %v120 = vadd.f32 %v97, %v103
    %v121 = vand.u32 2147483647, %v105
    %vm122 = vcmp.le.f32.partialorder %v121, 0.7853982
    %vm123 = vcmp.lt.s32.totalorder %v105, 0
    %v124 = vand.u32 %v105, 2139095040
    %v125 = vshrl.u32 %v124, 23
    %v126 = vsub.s32 %v125, 127
    %v127 = vand.u32 2147483647, %v105
    %v128 = vand.u32 %v127, 8388607
    %v129 = vor.u32 %v128, 8388608
    %v130 = vsub.s32 0, %v129
    %v131 = vadd.s32 %v126, 1
    %vm132 = vcmp.gt.s32.totalorder %v131, 0
    %v133 = vsel %vm132, %v131, 0
    %v134 = vshrl.u32 %v133, 5
    %v135 = vand.u32 %v133, 31
    %v136 = vsub.s32 32, %v135
    %v137 = vshrl.u32 683565275, %v136
    %v138 = vshll.u32 683565275, %v135
    %v139 = vshrl.u32 2475754826, %v136
    %v140 = vor.u32 %v138, %v139
    %v141 = vshll.u32 2475754826, %v135
    %v142 = vshrl.u32 2131351028, %v136
    %v143 = vor.u32 %v141, %v142
    %v144 = vshll.u32 2131351028, %v135
    %v145 = vshrl.u32 2102212464, %v136
    %v146 = vor.u32 %v144, %v145
    %v147 = vshll.u32 2102212464, %v135
    %v148 = vshrl.u32 920167782, %v136
    %v149 = vor.u32 %v147, %v148
    %v150 = vshll.u32 920167782, %v135
    %v151 = vshrl.u32 1326507024, %v136
    %v152 = vor.u32 %v150, %v151
    %vm153 = vcmp.lt.s32.totalorder %v134, 1
    %vm154 = vcmp.lt.s32.totalorder %v134, 2
    %vm155 = vcmp.lt.s32.totalorder %v134, 3
    %vm156 = vcmp.lt.s32.totalorder %v134, 4
    %v157 = vsel %vm153, %v137, %v140
    %v158 = vsel %vm156, %v146, 2102212464
    %v159 = vsel %vm155, %v143, %v158
    %v160 = vsel %vm154, %v157, %v159
    %v161 = vsel %vm153, %v140, %v143
    %v162 = vsel %vm156, %v149, 920167782
    %v163 = vsel %vm155, %v146, %v162
    %v164 = vsel %vm154, %v161, %v163
    %v165 = vsel %vm153, %v143, %v146
    %v166 = vsel %vm156, %v152, 1326507024
    %v167 = vsel %vm155, %v149, %v166
    %v168 = vsel %vm154, %v165, %v167
    %v169 = vshll.u32 %v129, 8
    %v170 = vmul.u32.u64.compose %v169, %v168
    %v171 = vextract.low.u32 %v170
    %v172 = vextract.high.u32 %v170
    %v173 = vmul.u32.u64.compose %v169, %v164
    %v174 = vextract.low.u32 %v173
    %v175 = vextract.high.u32 %v173
    %v176 = vmul.u32 %v169, %v160
    %v177 = vadd.s32 %v172, %v174
    %vm178 = vc.u32 %v172, %v174
    %v179 = vadd.s32 %v175, 1
    %v180 = vsel %vm178, %v179, %v175
    %v181 = vadd.s32 %v176, %v180
    %v182 = vadd.s32 %v181, 536870912
    %v183 = vshrl.u32 %v182, 30
    %v184 = vshll.u32 %v183, 30
    %v185 = vsub.s32 %v181, %v184
    %vm186 = vcmp.lt.s32.totalorder %v185, 0
    %v187 = vsub.s32 0, %v185
    %v188 = vsel %vm186, %v187, %v185
    %v189 = vclz %v188
    %v190 = vsub.s32 %v189, 2
    %vm191 = vcmp.gt.s32.totalorder 0, %v190
    %v192 = vsel %vm191, 0, %v190
    %v193 = vsub.s32 32, %v192
    %v194 = vshll.u32 %v185, %v192
    %v195 = vshrl.u32 %v177, %v193
    %v196 = vor.u32 %v194, %v195
    %v197 = vsub.s32 4294967266, %v192
    %v198 = vadd.s32 %v197, 127
    %v199 = vshll.u32 %v198, 23
    %v200 = vor.u32 4788187, %v199
    %v201 = vand.u32 2147483647, %v200
    %v203 = vcvt.s32.f32 %v196
    %v204 = vmul.f32 %v203, %v201
    %v205 = vxor.u32 %v204, 2147483648
    %v206 = vsel %vm123, %v205, %v204
    %v207 = vsub.s32 4, %v183
    %v208 = vsel %vm123, %v207, %v183
    %v209 = vsel %vm122, %v105, %v206
    %v210 = vsel %vm122, 0, %v208
    %v211 = vcosq.f32.pop %v209
    %v212 = vsinq.f32.pop %v209
    %vm213 = vweird.f32 %v105
    %v214 = vadd.s32 %v210, 3
    %v215 = vand.u32 %v214, 3
    %vm216 = vcmp.lt.s32.totalorder %v215, 2
    %vm217 = vcmp.eq.s32.totalorder %v215, 0
    %v218 = vxor.u32 %v212, 2147483648
    %v219 = vsel %vm217, %v211, %v218
    %vm220 = vcmp.eq.s32.totalorder %v215, 2
    %v221 = vxor.u32 %v211, 2147483648
    %v222 = vsel %vm220, %v221, %v212
    %v223 = vsel %vm216, %v219, %v222
    %v224 = vsel %vm213, nan, %v223
    %v225 = vand.u32 2147483647, %v106
    %vm226 = vcmp.le.f32.partialorder %v225, 0.7853982
    %vm227 = vcmp.lt.s32.totalorder %v106, 0
    %v228 = vand.u32 %v106, 2139095040
    %v229 = vshrl.u32 %v228, 23
    %v230 = vsub.s32 %v229, 127
    %v231 = vand.u32 2147483647, %v106
    %v232 = vand.u32 %v231, 8388607
    %v233 = vor.u32 %v232, 8388608
    %v234 = vsub.s32 0, %v233
    %v235 = vadd.s32 %v230, 1
    %vm236 = vcmp.gt.s32.totalorder %v235, 0
    %v237 = vsel %vm236, %v235, 0
    %v238 = vshrl.u32 %v237, 5
    %v239 = vand.u32 %v237, 31
    %v240 = vsub.s32 32, %v239
    %v241 = vshrl.u32 683565275, %v240
    %v242 = vshll.u32 683565275, %v239
    %v243 = vshrl.u32 2475754826, %v240
    %v244 = vor.u32 %v242, %v243
    %v245 = vshll.u32 2475754826, %v239
    %v246 = vshrl.u32 2131351028, %v240
    %v247 = vor.u32 %v245, %v246
    %v248 = vshll.u32 2131351028, %v239
    %v249 = vshrl.u32 2102212464, %v240
    %v250 = vor.u32 %v248, %v249
    %v251 = vshll.u32 2102212464, %v239
    %v252 = vshrl.u32 920167782, %v240
    %v253 = vor.u32 %v251, %v252
    %v254 = vshll.u32 920167782, %v239
    %v255 = vshrl.u32 1326507024, %v240
    %v256 = vor.u32 %v254, %v255
    %vm257 = vcmp.lt.s32.totalorder %v238, 1
    %vm258 = vcmp.lt.s32.totalorder %v238, 2
    %vm259 = vcmp.lt.s32.totalorder %v238, 3
    %vm260 = vcmp.lt.s32.totalorder %v238, 4
    %v261 = vsel %vm257, %v241, %v244
    %v262 = vsel %vm260, %v250, 2102212464
    %v263 = vsel %vm259, %v247, %v262
    %v264 = vsel %vm258, %v261, %v263
    %v265 = vsel %vm257, %v244, %v247
    %v266 = vsel %vm260, %v253, 920167782
    %v267 = vsel %vm259, %v250, %v266
    %v268 = vsel %vm258, %v265, %v267
    %v269 = vsel %vm257, %v247, %v250
    %v270 = vsel %vm260, %v256, 1326507024
    %v271 = vsel %vm259, %v253, %v270
    %v272 = vsel %vm258, %v269, %v271
    %v273 = vshll.u32 %v233, 8
    %v274 = vmul.u32.u64.compose %v273, %v272
    %v275 = vextract.low.u32 %v274
    %v276 = vextract.high.u32 %v274
    %v277 = vmul.u32.u64.compose %v273, %v268
    %v278 = vextract.low.u32 %v277
    %v279 = vextract.high.u32 %v277
    %v280 = vmul.u32 %v273, %v264
    %v281 = vadd.s32 %v276, %v278
    %vm282 = vc.u32 %v276, %v278
    %v283 = vadd.s32 %v279, 1
    %v284 = vsel %vm282, %v283, %v279
    %v285 = vadd.s32 %v280, %v284
    %v286 = vadd.s32 %v285, 536870912
    %v287 = vshrl.u32 %v286, 30
    %v288 = vshll.u32 %v287, 30
    %v289 = vsub.s32 %v285, %v288
    %vm290 = vcmp.lt.s32.totalorder %v289, 0
    %v291 = vsub.s32 0, %v289
    %v292 = vsel %vm290, %v291, %v289
    %v293 = vclz %v292
    %v294 = vsub.s32 %v293, 2
    %vm295 = vcmp.gt.s32.totalorder 0, %v294
    %v296 = vsel %vm295, 0, %v294
    %v297 = vsub.s32 32, %v296
    %v298 = vshll.u32 %v289, %v296
    %v299 = vshrl.u32 %v281, %v297
    %v300 = vor.u32 %v298, %v299
    %v301 = vsub.s32 4294967266, %v296
    %v302 = vadd.s32 %v301, 127
    %v303 = vshll.u32 %v302, 23
    %v304 = vor.u32 4788187, %v303
    %v305 = vand.u32 2147483647, %v304
    %v307 = vcvt.s32.f32 %v300
    %v308 = vmul.f32 %v307, %v305
    %v309 = vxor.u32 %v308, 2147483648
    %v310 = vsel %vm227, %v309, %v308
    %v311 = vsub.s32 4, %v287
    %v312 = vsel %vm227, %v311, %v287
    %v313 = vsel %vm226, %v106, %v310
    %v314 = vsel %vm226, 0, %v312
    %v315 = vcosq.f32.pop %v313
    %v316 = vsinq.f32.pop %v313
    %vm317 = vweird.f32 %v106
    %v318 = vadd.s32 %v314, 3
    %v319 = vand.u32 %v318, 3
    %vm320 = vcmp.lt.s32.totalorder %v319, 2
    %vm321 = vcmp.eq.s32.totalorder %v319, 0
    %v322 = vxor.u32 %v316, 2147483648
    %v323 = vsel %vm321, %v315, %v322
    %vm324 = vcmp.eq.s32.totalorder %v319, 2
    %v325 = vxor.u32 %v315, 2147483648
    %v326 = vsel %vm324, %v325, %v316
    %v327 = vsel %vm320, %v323, %v326
    %v328 = vsel %vm317, nan, %v327
    %v329 = vand.u32 2147483647, %v107
    %vm330 = vcmp.le.f32.partialorder %v329, 0.7853982
    %vm331 = vcmp.lt.s32.totalorder %v107, 0
    %v332 = vand.u32 %v107, 2139095040
    %v333 = vshrl.u32 %v332, 23
    %v334 = vsub.s32 %v333, 127
    %v335 = vand.u32 2147483647, %v107
    %v336 = vand.u32 %v335, 8388607
    %v337 = vor.u32 %v336, 8388608
    %v338 = vsub.s32 0, %v337
    %v339 = vadd.s32 %v334, 1
    %vm340 = vcmp.gt.s32.totalorder %v339, 0
    %v341 = vsel %vm340, %v339, 0
    %v342 = vshrl.u32 %v341, 5
    %v343 = vand.u32 %v341, 31
    %v344 = vsub.s32 32, %v343
    %v345 = vshrl.u32 683565275, %v344
    %v346 = vshll.u32 683565275, %v343
    %v347 = vshrl.u32 2475754826, %v344
    %v348 = vor.u32 %v346, %v347
    %v349 = vshll.u32 2475754826, %v343
    %v350 = vshrl.u32 2131351028, %v344
    %v351 = vor.u32 %v349, %v350
    %v352 = vshll.u32 2131351028, %v343
    %v353 = vshrl.u32 2102212464, %v344
    %v354 = vor.u32 %v352, %v353
    %v355 = vshll.u32 2102212464, %v343
    %v356 = vshrl.u32 920167782, %v344
    %v357 = vor.u32 %v355, %v356
    %v358 = vshll.u32 920167782, %v343
    %v359 = vshrl.u32 1326507024, %v344
    %v360 = vor.u32 %v358, %v359
    %vm361 = vcmp.lt.s32.totalorder %v342, 1
    %vm362 = vcmp.lt.s32.totalorder %v342, 2
    %vm363 = vcmp.lt.s32.totalorder %v342, 3
    %vm364 = vcmp.lt.s32.totalorder %v342, 4
    %v365 = vsel %vm361, %v345, %v348
    %v366 = vsel %vm364, %v354, 2102212464
    %v367 = vsel %vm363, %v351, %v366
    %v368 = vsel %vm362, %v365, %v367
    %v369 = vsel %vm361, %v348, %v351
    %v370 = vsel %vm364, %v357, 920167782
    %v371 = vsel %vm363, %v354, %v370
    %v372 = vsel %vm362, %v369, %v371
    %v373 = vsel %vm361, %v351, %v354
    %v374 = vsel %vm364, %v360, 1326507024
    %v375 = vsel %vm363, %v357, %v374
    %v376 = vsel %vm362, %v373, %v375
    %v377 = vshll.u32 %v337, 8
    %v378 = vmul.u32.u64.compose %v377, %v376
    %v379 = vextract.low.u32 %v378
    %v380 = vextract.high.u32 %v378
    %v381 = vmul.u32.u64.compose %v377, %v372
    %v382 = vextract.low.u32 %v381
    %v383 = vextract.high.u32 %v381
    %v384 = vmul.u32 %v377, %v368
    %v385 = vadd.s32 %v380, %v382
    %vm386 = vc.u32 %v380, %v382
    %v387 = vadd.s32 %v383, 1
    %v388 = vsel %vm386, %v387, %v383
    %v389 = vadd.s32 %v384, %v388
    %v390 = vadd.s32 %v389, 536870912
    %v391 = vshrl.u32 %v390, 30
    %v392 = vshll.u32 %v391, 30
    %v393 = vsub.s32 %v389, %v392
    %vm394 = vcmp.lt.s32.totalorder %v393, 0
    %v395 = vsub.s32 0, %v393
    %v396 = vsel %vm394, %v395, %v393
    %v397 = vclz %v396
    %v398 = vsub.s32 %v397, 2
    %vm399 = vcmp.gt.s32.totalorder 0, %v398
    %v400 = vsel %vm399, 0, %v398
    %v401 = vsub.s32 32, %v400
    %v402 = vshll.u32 %v393, %v400
    %v403 = vshrl.u32 %v385, %v401
    %v404 = vor.u32 %v402, %v403
    %v405 = vsub.s32 4294967266, %v400
    %v406 = vadd.s32 %v405, 127
    %v407 = vshll.u32 %v406, 23
    %v408 = vor.u32 4788187, %v407
    %v409 = vand.u32 2147483647, %v408
    %v411 = vcvt.s32.f32 %v404
    %v412 = vmul.f32 %v411, %v409
    %v413 = vxor.u32 %v412, 2147483648
    %v414 = vsel %vm331, %v413, %v412
    %v415 = vsub.s32 4, %v391
    %v416 = vsel %vm331, %v415, %v391
    %v417 = vsel %vm330, %v107, %v414
    %v418 = vsel %vm330, 0, %v416
    %v419 = vcosq.f32.pop %v417
    %v420 = vsinq.f32.pop %v417
    %vm421 = vweird.f32 %v107
    %v422 = vadd.s32 %v418, 3
    %v423 = vand.u32 %v422, 3
    %vm424 = vcmp.lt.s32.totalorder %v423, 2
    %vm425 = vcmp.eq.s32.totalorder %v423, 0
    %v426 = vxor.u32 %v420, 2147483648
    %v427 = vsel %vm425, %v419, %v426
    %vm428 = vcmp.eq.s32.totalorder %v423, 2
    %v429 = vxor.u32 %v419, 2147483648
    %v430 = vsel %vm428, %v429, %v420
    %v431 = vsel %vm424, %v427, %v430
    %v432 = vsel %vm421, nan, %v431
    %v433 = vand.u32 2147483647, %v108
    %vm434 = vcmp.le.f32.partialorder %v433, 0.7853982
    %vm435 = vcmp.lt.s32.totalorder %v108, 0
    %v436 = vand.u32 %v108, 2139095040
    %v437 = vshrl.u32 %v436, 23
    %v438 = vsub.s32 %v437, 127
    %v439 = vand.u32 2147483647, %v108
    %v440 = vand.u32 %v439, 8388607
    %v441 = vor.u32 %v440, 8388608
    %v442 = vsub.s32 0, %v441
    %v443 = vadd.s32 %v438, 1
    %vm444 = vcmp.gt.s32.totalorder %v443, 0
    %v445 = vsel %vm444, %v443, 0
    %v446 = vshrl.u32 %v445, 5
    %v447 = vand.u32 %v445, 31
    %v448 = vsub.s32 32, %v447
    %v449 = vshrl.u32 683565275, %v448
    %v450 = vshll.u32 683565275, %v447
    %v451 = vshrl.u32 2475754826, %v448
    %v452 = vor.u32 %v450, %v451
    %v453 = vshll.u32 2475754826, %v447
    %v454 = vshrl.u32 2131351028, %v448
    %v455 = vor.u32 %v453, %v454
    %v456 = vshll.u32 2131351028, %v447
    %v457 = vshrl.u32 2102212464, %v448
    %v458 = vor.u32 %v456, %v457
    %v459 = vshll.u32 2102212464, %v447
    %v460 = vshrl.u32 920167782, %v448
    %v461 = vor.u32 %v459, %v460
    %v462 = vshll.u32 920167782, %v447
    %v463 = vshrl.u32 1326507024, %v448
    %v464 = vor.u32 %v462, %v463
    %vm465 = vcmp.lt.s32.totalorder %v446, 1
    %vm466 = vcmp.lt.s32.totalorder %v446, 2
    %vm467 = vcmp.lt.s32.totalorder %v446, 3
    %vm468 = vcmp.lt.s32.totalorder %v446, 4
    %v469 = vsel %vm465, %v449, %v452
    %v470 = vsel %vm468, %v458, 2102212464
    %v471 = vsel %vm467, %v455, %v470
    %v472 = vsel %vm466, %v469, %v471
    %v473 = vsel %vm465, %v452, %v455
    %v474 = vsel %vm468, %v461, 920167782
    %v475 = vsel %vm467, %v458, %v474
    %v476 = vsel %vm466, %v473, %v475
    %v477 = vsel %vm465, %v455, %v458
    %v478 = vsel %vm468, %v464, 1326507024
    %v479 = vsel %vm467, %v461, %v478
    %v480 = vsel %vm466, %v477, %v479
    %v481 = vshll.u32 %v441, 8
    %v482 = vmul.u32.u64.compose %v481, %v480
    %v483 = vextract.low.u32 %v482
    %v484 = vextract.high.u32 %v482
    %v485 = vmul.u32.u64.compose %v481, %v476
    %v486 = vextract.low.u32 %v485
    %v487 = vextract.high.u32 %v485
    %v488 = vmul.u32 %v481, %v472
    %v489 = vadd.s32 %v484, %v486
    %vm490 = vc.u32 %v484, %v486
    %v491 = vadd.s32 %v487, 1
    %v492 = vsel %vm490, %v491, %v487
    %v493 = vadd.s32 %v488, %v492
    %v494 = vadd.s32 %v493, 536870912
    %v495 = vshrl.u32 %v494, 30
    %v496 = vshll.u32 %v495, 30
    %v497 = vsub.s32 %v493, %v496
    %vm498 = vcmp.lt.s32.totalorder %v497, 0
    %v499 = vsub.s32 0, %v497
    %v500 = vsel %vm498, %v499, %v497
    %v501 = vclz %v500
    %v502 = vsub.s32 %v501, 2
    %vm503 = vcmp.gt.s32.totalorder 0, %v502
    %v504 = vsel %vm503, 0, %v502
    %v505 = vsub.s32 32, %v504
    %v506 = vshll.u32 %v497, %v504
    %v507 = vshrl.u32 %v489, %v505
    %v508 = vor.u32 %v506, %v507
    %v509 = vsub.s32 4294967266, %v504
    %v510 = vadd.s32 %v509, 127
    %v511 = vshll.u32 %v510, 23
    %v512 = vor.u32 4788187, %v511
    %v513 = vand.u32 2147483647, %v512
    %v515 = vcvt.s32.f32 %v508
    %v516 = vmul.f32 %v515, %v513
    %v517 = vxor.u32 %v516, 2147483648
    %v518 = vsel %vm435, %v517, %v516
    %v519 = vsub.s32 4, %v495
    %v520 = vsel %vm435, %v519, %v495
    %v521 = vsel %vm434, %v108, %v518
    %v522 = vsel %vm434, 0, %v520
    %v523 = vcosq.f32.pop %v521
    %v524 = vsinq.f32.pop %v521
    %vm525 = vweird.f32 %v108
    %v526 = vadd.s32 %v522, 3
    %v527 = vand.u32 %v526, 3
    %vm528 = vcmp.lt.s32.totalorder %v527, 2
    %vm529 = vcmp.eq.s32.totalorder %v527, 0
    %v530 = vxor.u32 %v524, 2147483648
    %v531 = vsel %vm529, %v523, %v530
    %vm532 = vcmp.eq.s32.totalorder %v527, 2
    %v533 = vxor.u32 %v523, 2147483648
    %v534 = vsel %vm532, %v533, %v524
    %v535 = vsel %vm528, %v531, %v534
    %v536 = vsel %vm525, nan, %v535
    %v537 = vand.u32 2147483647, %v109
    %vm538 = vcmp.le.f32.partialorder %v537, 0.7853982
    %vm539 = vcmp.lt.s32.totalorder %v109, 0
    %v540 = vand.u32 %v109, 2139095040
    %v541 = vshrl.u32 %v540, 23
    %v542 = vsub.s32 %v541, 127
    %v543 = vand.u32 2147483647, %v109
    %v544 = vand.u32 %v543, 8388607
    %v545 = vor.u32 %v544, 8388608
    %v546 = vsub.s32 0, %v545
    %v547 = vadd.s32 %v542, 1
    %vm548 = vcmp.gt.s32.totalorder %v547, 0
    %v549 = vsel %vm548, %v547, 0
    %v550 = vshrl.u32 %v549, 5
    %v551 = vand.u32 %v549, 31
    %v552 = vsub.s32 32, %v551
    %v553 = vshrl.u32 683565275, %v552
    %v554 = vshll.u32 683565275, %v551
    %v555 = vshrl.u32 2475754826, %v552
    %v556 = vor.u32 %v554, %v555
    %v557 = vshll.u32 2475754826, %v551
    %v558 = vshrl.u32 2131351028, %v552
    %v559 = vor.u32 %v557, %v558
    %v560 = vshll.u32 2131351028, %v551
    %v561 = vshrl.u32 2102212464, %v552
    %v562 = vor.u32 %v560, %v561
    %v563 = vshll.u32 2102212464, %v551
    %v564 = vshrl.u32 920167782, %v552
    %v565 = vor.u32 %v563, %v564
    %v566 = vshll.u32 920167782, %v551
    %v567 = vshrl.u32 1326507024, %v552
    %v568 = vor.u32 %v566, %v567
    %vm569 = vcmp.lt.s32.totalorder %v550, 1
    %vm570 = vcmp.lt.s32.totalorder %v550, 2
    %vm571 = vcmp.lt.s32.totalorder %v550, 3
    %vm572 = vcmp.lt.s32.totalorder %v550, 4
    %v573 = vsel %vm569, %v553, %v556
    %v574 = vsel %vm572, %v562, 2102212464
    %v575 = vsel %vm571, %v559, %v574
    %v576 = vsel %vm570, %v573, %v575
    %v577 = vsel %vm569, %v556, %v559
    %v578 = vsel %vm572, %v565, 920167782
    %v579 = vsel %vm571, %v562, %v578
    %v580 = vsel %vm570, %v577, %v579
    %v581 = vsel %vm569, %v559, %v562
    %v582 = vsel %vm572, %v568, 1326507024
    %v583 = vsel %vm571, %v565, %v582
    %v584 = vsel %vm570, %v581, %v583
    %v585 = vshll.u32 %v545, 8
    %v586 = vmul.u32.u64.compose %v585, %v584
    %v587 = vextract.low.u32 %v586
    %v588 = vextract.high.u32 %v586
    %v589 = vmul.u32.u64.compose %v585, %v580
    %v590 = vextract.low.u32 %v589
    %v591 = vextract.high.u32 %v589
    %v592 = vmul.u32 %v585, %v576
    %v593 = vadd.s32 %v588, %v590
    %vm594 = vc.u32 %v588, %v590
    %v595 = vadd.s32 %v591, 1
    %v596 = vsel %vm594, %v595, %v591
    %v597 = vadd.s32 %v592, %v596
    %v598 = vadd.s32 %v597, 536870912
    %v599 = vshrl.u32 %v598, 30
    %v600 = vshll.u32 %v599, 30
    %v601 = vsub.s32 %v597, %v600
    %vm602 = vcmp.lt.s32.totalorder %v601, 0
    %v603 = vsub.s32 0, %v601
    %v604 = vsel %vm602, %v603, %v601
    %v605 = vclz %v604
    %v606 = vsub.s32 %v605, 2
    %vm607 = vcmp.gt.s32.totalorder 0, %v606
    %v608 = vsel %vm607, 0, %v606
    %v609 = vsub.s32 32, %v608
    %v610 = vshll.u32 %v601, %v608
    %v611 = vshrl.u32 %v593, %v609
    %v612 = vor.u32 %v610, %v611
    %v613 = vsub.s32 4294967266, %v608
    %v614 = vadd.s32 %v613, 127
    %v615 = vshll.u32 %v614, 23
    %v616 = vor.u32 4788187, %v615
    %v617 = vand.u32 2147483647, %v616
    %v619 = vcvt.s32.f32 %v612
    %v620 = vmul.f32 %v619, %v617
    %v621 = vxor.u32 %v620, 2147483648
    %v622 = vsel %vm539, %v621, %v620
    %v623 = vsub.s32 4, %v599
    %v624 = vsel %vm539, %v623, %v599
    %v625 = vsel %vm538, %v109, %v622
    %v626 = vsel %vm538, 0, %v624
    %v627 = vcosq.f32.pop %v625
    %v628 = vsinq.f32.pop %v625
    %vm629 = vweird.f32 %v109
    %v630 = vadd.s32 %v626, 3
    %v631 = vand.u32 %v630, 3
    %vm632 = vcmp.lt.s32.totalorder %v631, 2
    %vm633 = vcmp.eq.s32.totalorder %v631, 0
    %v634 = vxor.u32 %v628, 2147483648
    %v635 = vsel %vm633, %v627, %v634
    %vm636 = vcmp.eq.s32.totalorder %v631, 2
    %v637 = vxor.u32 %v627, 2147483648
    %v638 = vsel %vm636, %v637, %v628
    %v639 = vsel %vm632, %v635, %v638
    %v640 = vsel %vm629, nan, %v639
    %v641 = vand.u32 2147483647, %v110
    %vm642 = vcmp.le.f32.partialorder %v641, 0.7853982
    %vm643 = vcmp.lt.s32.totalorder %v110, 0
    %v644 = vand.u32 %v110, 2139095040
    %v645 = vshrl.u32 %v644, 23
    %v646 = vsub.s32 %v645, 127
    %v647 = vand.u32 2147483647, %v110
    %v648 = vand.u32 %v647, 8388607
    %v649 = vor.u32 %v648, 8388608
    %v650 = vsub.s32 0, %v649
    %v651 = vadd.s32 %v646, 1
    %vm652 = vcmp.gt.s32.totalorder %v651, 0
    %v653 = vsel %vm652, %v651, 0
    %v654 = vshrl.u32 %v653, 5
    %v655 = vand.u32 %v653, 31
    %v656 = vsub.s32 32, %v655
    %v657 = vshrl.u32 683565275, %v656
    %v658 = vshll.u32 683565275, %v655
    %v659 = vshrl.u32 2475754826, %v656
    %v660 = vor.u32 %v658, %v659
    %v661 = vshll.u32 2475754826, %v655
    %v662 = vshrl.u32 2131351028, %v656
    %v663 = vor.u32 %v661, %v662
    %v664 = vshll.u32 2131351028, %v655
    %v665 = vshrl.u32 2102212464, %v656
    %v666 = vor.u32 %v664, %v665
    %v667 = vshll.u32 2102212464, %v655
    %v668 = vshrl.u32 920167782, %v656
    %v669 = vor.u32 %v667, %v668
    %v670 = vshll.u32 920167782, %v655
    %v671 = vshrl.u32 1326507024, %v656
    %v672 = vor.u32 %v670, %v671
    %vm673 = vcmp.lt.s32.totalorder %v654, 1
    %vm674 = vcmp.lt.s32.totalorder %v654, 2
    %vm675 = vcmp.lt.s32.totalorder %v654, 3
    %vm676 = vcmp.lt.s32.totalorder %v654, 4
    %v677 = vsel %vm673, %v657, %v660
    %v678 = vsel %vm676, %v666, 2102212464
    %v679 = vsel %vm675, %v663, %v678
    %v680 = vsel %vm674, %v677, %v679
    %v681 = vsel %vm673, %v660, %v663
    %v682 = vsel %vm676, %v669, 920167782
    %v683 = vsel %vm675, %v666, %v682
    %v684 = vsel %vm674, %v681, %v683
    %v685 = vsel %vm673, %v663, %v666
    %v686 = vsel %vm676, %v672, 1326507024
    %v687 = vsel %vm675, %v669, %v686
    %v688 = vsel %vm674, %v685, %v687
    %v689 = vshll.u32 %v649, 8
    %v690 = vmul.u32.u64.compose %v689, %v688
    %v691 = vextract.low.u32 %v690
    %v692 = vextract.high.u32 %v690
    %v693 = vmul.u32.u64.compose %v689, %v684
    %v694 = vextract.low.u32 %v693
    %v695 = vextract.high.u32 %v693
    %v696 = vmul.u32 %v689, %v680
    %v697 = vadd.s32 %v692, %v694
    %vm698 = vc.u32 %v692, %v694
    %v699 = vadd.s32 %v695, 1
    %v700 = vsel %vm698, %v699, %v695
    %v701 = vadd.s32 %v696, %v700
    %v702 = vadd.s32 %v701, 536870912
    %v703 = vshrl.u32 %v702, 30
    %v704 = vshll.u32 %v703, 30
    %v705 = vsub.s32 %v701, %v704
    %vm706 = vcmp.lt.s32.totalorder %v705, 0
    %v707 = vsub.s32 0, %v705
    %v708 = vsel %vm706, %v707, %v705
    %v709 = vclz %v708
    %v710 = vsub.s32 %v709, 2
    %vm711 = vcmp.gt.s32.totalorder 0, %v710
    %v712 = vsel %vm711, 0, %v710
    %v713 = vsub.s32 32, %v712
    %v714 = vshll.u32 %v705, %v712
    %v715 = vshrl.u32 %v697, %v713
    %v716 = vor.u32 %v714, %v715
    %v717 = vsub.s32 4294967266, %v712
    %v718 = vadd.s32 %v717, 127
    %v719 = vshll.u32 %v718, 23
    %v720 = vor.u32 4788187, %v719
    %v721 = vand.u32 2147483647, %v720
    %v723 = vcvt.s32.f32 %v716
    %v724 = vmul.f32 %v723, %v721
    %v725 = vxor.u32 %v724, 2147483648
    %v726 = vsel %vm643, %v725, %v724
    %v727 = vsub.s32 4, %v703
    %v728 = vsel %vm643, %v727, %v703
    %v729 = vsel %vm642, %v110, %v726
    %v730 = vsel %vm642, 0, %v728
    %v731 = vcosq.f32.pop %v729
    %v732 = vsinq.f32.pop %v729
    %vm733 = vweird.f32 %v110
    %v734 = vadd.s32 %v730, 3
    %v735 = vand.u32 %v734, 3
    %vm736 = vcmp.lt.s32.totalorder %v735, 2
    %vm737 = vcmp.eq.s32.totalorder %v735, 0
    %v738 = vxor.u32 %v732, 2147483648
    %v739 = vsel %vm737, %v731, %v738
    %vm740 = vcmp.eq.s32.totalorder %v735, 2
    %v741 = vxor.u32 %v731, 2147483648
    %v742 = vsel %vm740, %v741, %v732
    %v743 = vsel %vm736, %v739, %v742
    %v744 = vsel %vm733, nan, %v743
    %v745 = vand.u32 2147483647, %v111
    %vm746 = vcmp.le.f32.partialorder %v745, 0.7853982
    %vm747 = vcmp.lt.s32.totalorder %v111, 0
    %v748 = vand.u32 %v111, 2139095040
    %v749 = vshrl.u32 %v748, 23
    %v750 = vsub.s32 %v749, 127
    %v751 = vand.u32 2147483647, %v111
    %v752 = vand.u32 %v751, 8388607
    %v753 = vor.u32 %v752, 8388608
    %v754 = vsub.s32 0, %v753
    %v755 = vadd.s32 %v750, 1
    %vm756 = vcmp.gt.s32.totalorder %v755, 0
    %v757 = vsel %vm756, %v755, 0
    %v758 = vshrl.u32 %v757, 5
    %v759 = vand.u32 %v757, 31
    %v760 = vsub.s32 32, %v759
    %v761 = vshrl.u32 683565275, %v760
    %v762 = vshll.u32 683565275, %v759
    %v763 = vshrl.u32 2475754826, %v760
    %v764 = vor.u32 %v762, %v763
    %v765 = vshll.u32 2475754826, %v759
    %v766 = vshrl.u32 2131351028, %v760
    %v767 = vor.u32 %v765, %v766
    %v768 = vshll.u32 2131351028, %v759
    %v769 = vshrl.u32 2102212464, %v760
    %v770 = vor.u32 %v768, %v769
    %v771 = vshll.u32 2102212464, %v759
    %v772 = vshrl.u32 920167782, %v760
    %v773 = vor.u32 %v771, %v772
    %v774 = vshll.u32 920167782, %v759
    %v775 = vshrl.u32 1326507024, %v760
    %v776 = vor.u32 %v774, %v775
    %vm777 = vcmp.lt.s32.totalorder %v758, 1
    %vm778 = vcmp.lt.s32.totalorder %v758, 2
    %vm779 = vcmp.lt.s32.totalorder %v758, 3
    %vm780 = vcmp.lt.s32.totalorder %v758, 4
    %v781 = vsel %vm777, %v761, %v764
    %v782 = vsel %vm780, %v770, 2102212464
    %v783 = vsel %vm779, %v767, %v782
    %v784 = vsel %vm778, %v781, %v783
    %v785 = vsel %vm777, %v764, %v767
    %v786 = vsel %vm780, %v773, 920167782
    %v787 = vsel %vm779, %v770, %v786
    %v788 = vsel %vm778, %v785, %v787
    %v789 = vsel %vm777, %v767, %v770
    %v790 = vsel %vm780, %v776, 1326507024
    %v791 = vsel %vm779, %v773, %v790
    %v792 = vsel %vm778, %v789, %v791
    %v793 = vshll.u32 %v753, 8
    %v794 = vmul.u32.u64.compose %v793, %v792
    %v795 = vextract.low.u32 %v794
    %v796 = vextract.high.u32 %v794
    %v797 = vmul.u32.u64.compose %v793, %v788
    %v798 = vextract.low.u32 %v797
    %v799 = vextract.high.u32 %v797
    %v800 = vmul.u32 %v793, %v784
    %v801 = vadd.s32 %v796, %v798
    %vm802 = vc.u32 %v796, %v798
    %v803 = vadd.s32 %v799, 1
    %v804 = vsel %vm802, %v803, %v799
    %v805 = vadd.s32 %v800, %v804
    %v806 = vadd.s32 %v805, 536870912
    %v807 = vshrl.u32 %v806, 30
    %v808 = vshll.u32 %v807, 30
    %v809 = vsub.s32 %v805, %v808
    %vm810 = vcmp.lt.s32.totalorder %v809, 0
    %v811 = vsub.s32 0, %v809
    %v812 = vsel %vm810, %v811, %v809
    %v813 = vclz %v812
    %v814 = vsub.s32 %v813, 2
    %vm815 = vcmp.gt.s32.totalorder 0, %v814
    %v816 = vsel %vm815, 0, %v814
    %v817 = vsub.s32 32, %v816
    %v818 = vshll.u32 %v809, %v816
    %v819 = vshrl.u32 %v801, %v817
    %v820 = vor.u32 %v818, %v819
    %v821 = vsub.s32 4294967266, %v816
    %v822 = vadd.s32 %v821, 127
    %v823 = vshll.u32 %v822, 23
    %v824 = vor.u32 4788187, %v823
    %v825 = vand.u32 2147483647, %v824
    %v827 = vcvt.s32.f32 %v820
    %v828 = vmul.f32 %v827, %v825
    %v829 = vxor.u32 %v828, 2147483648
    %v830 = vsel %vm747, %v829, %v828
    %v831 = vsub.s32 4, %v807
    %v832 = vsel %vm747, %v831, %v807
    %v833 = vsel %vm746, %v111, %v830
    %v834 = vsel %vm746, 0, %v832
    %v835 = vcosq.f32.pop %v833
    %v836 = vsinq.f32.pop %v833
    %vm837 = vweird.f32 %v111
    %v838 = vadd.s32 %v834, 3
    %v839 = vand.u32 %v838, 3
    %vm840 = vcmp.lt.s32.totalorder %v839, 2
    %vm841 = vcmp.eq.s32.totalorder %v839, 0
    %v842 = vxor.u32 %v836, 2147483648
    %v843 = vsel %vm841, %v835, %v842
    %vm844 = vcmp.eq.s32.totalorder %v839, 2
    %v845 = vxor.u32 %v835, 2147483648
    %v846 = vsel %vm844, %v845, %v836
    %v847 = vsel %vm840, %v843, %v846
    %v848 = vsel %vm837, nan, %v847
    %v849 = vand.u32 2147483647, %v112
    %vm850 = vcmp.le.f32.partialorder %v849, 0.7853982
    %vm851 = vcmp.lt.s32.totalorder %v112, 0
    %v852 = vand.u32 %v112, 2139095040
    %v853 = vshrl.u32 %v852, 23
    %v854 = vsub.s32 %v853, 127
    %v855 = vand.u32 2147483647, %v112
    %v856 = vand.u32 %v855, 8388607
    %v857 = vor.u32 %v856, 8388608
    %v858 = vsub.s32 0, %v857
    %v859 = vadd.s32 %v854, 1
    %vm860 = vcmp.gt.s32.totalorder %v859, 0
    %v861 = vsel %vm860, %v859, 0
    %v862 = vshrl.u32 %v861, 5
    %v863 = vand.u32 %v861, 31
    %v864 = vsub.s32 32, %v863
    %v865 = vshrl.u32 683565275, %v864
    %v866 = vshll.u32 683565275, %v863
    %v867 = vshrl.u32 2475754826, %v864
    %v868 = vor.u32 %v866, %v867
    %v869 = vshll.u32 2475754826, %v863
    %v870 = vshrl.u32 2131351028, %v864
    %v871 = vor.u32 %v869, %v870
    %v872 = vshll.u32 2131351028, %v863
    %v873 = vshrl.u32 2102212464, %v864
    %v874 = vor.u32 %v872, %v873
    %v875 = vshll.u32 2102212464, %v863
    %v876 = vshrl.u32 920167782, %v864
    %v877 = vor.u32 %v875, %v876
    %v878 = vshll.u32 920167782, %v863
    %v879 = vshrl.u32 1326507024, %v864
    %v880 = vor.u32 %v878, %v879
    %vm881 = vcmp.lt.s32.totalorder %v862, 1
    %vm882 = vcmp.lt.s32.totalorder %v862, 2
    %vm883 = vcmp.lt.s32.totalorder %v862, 3
    %vm884 = vcmp.lt.s32.totalorder %v862, 4
    %v885 = vsel %vm881, %v865, %v868
    %v886 = vsel %vm884, %v874, 2102212464
    %v887 = vsel %vm883, %v871, %v886
    %v888 = vsel %vm882, %v885, %v887
    %v889 = vsel %vm881, %v868, %v871
    %v890 = vsel %vm884, %v877, 920167782
    %v891 = vsel %vm883, %v874, %v890
    %v892 = vsel %vm882, %v889, %v891
    %v893 = vsel %vm881, %v871, %v874
    %v894 = vsel %vm884, %v880, 1326507024
    %v895 = vsel %vm883, %v877, %v894
    %v896 = vsel %vm882, %v893, %v895
    %v897 = vshll.u32 %v857, 8
    %v898 = vmul.u32.u64.compose %v897, %v896
    %v899 = vextract.low.u32 %v898
    %v900 = vextract.high.u32 %v898
    %v901 = vmul.u32.u64.compose %v897, %v892
    %v902 = vextract.low.u32 %v901
    %v903 = vextract.high.u32 %v901
    %v904 = vmul.u32 %v897, %v888
    %v905 = vadd.s32 %v900, %v902
    %vm906 = vc.u32 %v900, %v902
    %v907 = vadd.s32 %v903, 1
    %v908 = vsel %vm906, %v907, %v903
    %v909 = vadd.s32 %v904, %v908
    %v910 = vadd.s32 %v909, 536870912
    %v911 = vshrl.u32 %v910, 30
    %v912 = vshll.u32 %v911, 30
    %v913 = vsub.s32 %v909, %v912
    %vm914 = vcmp.lt.s32.totalorder %v913, 0
    %v915 = vsub.s32 0, %v913
    %v916 = vsel %vm914, %v915, %v913
    %v917 = vclz %v916
    %v918 = vsub.s32 %v917, 2
    %vm919 = vcmp.gt.s32.totalorder 0, %v918
    %v920 = vsel %vm919, 0, %v918
    %v921 = vsub.s32 32, %v920
    %v922 = vshll.u32 %v913, %v920
    %v923 = vshrl.u32 %v905, %v921
    %v924 = vor.u32 %v922, %v923
    %v925 = vsub.s32 4294967266, %v920
    %v926 = vadd.s32 %v925, 127
    %v927 = vshll.u32 %v926, 23
    %v928 = vor.u32 4788187, %v927
    %v929 = vand.u32 2147483647, %v928
    %v931 = vcvt.s32.f32 %v924
    %v932 = vmul.f32 %v931, %v929
    %v933 = vxor.u32 %v932, 2147483648
    %v934 = vsel %vm851, %v933, %v932
    %v935 = vsub.s32 4, %v911
    %v936 = vsel %vm851, %v935, %v911
    %v937 = vsel %vm850, %v112, %v934
    %v938 = vsel %vm850, 0, %v936
    %v939 = vcosq.f32.pop %v937
    %v940 = vsinq.f32.pop %v937
    %vm941 = vweird.f32 %v112
    %v942 = vadd.s32 %v938, 3
    %v943 = vand.u32 %v942, 3
    %vm944 = vcmp.lt.s32.totalorder %v943, 2
    %vm945 = vcmp.eq.s32.totalorder %v943, 0
    %v946 = vxor.u32 %v940, 2147483648
    %v947 = vsel %vm945, %v939, %v946
    %vm948 = vcmp.eq.s32.totalorder %v943, 2
    %v949 = vxor.u32 %v939, 2147483648
    %v950 = vsel %vm948, %v949, %v940
    %v951 = vsel %vm944, %v947, %v950
    %v952 = vsel %vm941, nan, %v951
    %v953 = vand.u32 2147483647, %v113
    %vm954 = vcmp.le.f32.partialorder %v953, 0.7853982
    %vm955 = vcmp.lt.s32.totalorder %v113, 0
    %v956 = vand.u32 %v113, 2139095040
    %v957 = vshrl.u32 %v956, 23
    %v958 = vsub.s32 %v957, 127
    %v959 = vand.u32 2147483647, %v113
    %v960 = vand.u32 %v959, 8388607
    %v961 = vor.u32 %v960, 8388608
    %v962 = vsub.s32 0, %v961
    %v963 = vadd.s32 %v958, 1
    %vm964 = vcmp.gt.s32.totalorder %v963, 0
    %v965 = vsel %vm964, %v963, 0
    %v966 = vshrl.u32 %v965, 5
    %v967 = vand.u32 %v965, 31
    %v968 = vsub.s32 32, %v967
    %v969 = vshrl.u32 683565275, %v968
    %v970 = vshll.u32 683565275, %v967
    %v971 = vshrl.u32 2475754826, %v968
    %v972 = vor.u32 %v970, %v971
    %v973 = vshll.u32 2475754826, %v967
    %v974 = vshrl.u32 2131351028, %v968
    %v975 = vor.u32 %v973, %v974
    %v976 = vshll.u32 2131351028, %v967
    %v977 = vshrl.u32 2102212464, %v968
    %v978 = vor.u32 %v976, %v977
    %v979 = vshll.u32 2102212464, %v967
    %v980 = vshrl.u32 920167782, %v968
    %v981 = vor.u32 %v979, %v980
    %v982 = vshll.u32 920167782, %v967
    %v983 = vshrl.u32 1326507024, %v968
    %v984 = vor.u32 %v982, %v983
    %vm985 = vcmp.lt.s32.totalorder %v966, 1
    %vm986 = vcmp.lt.s32.totalorder %v966, 2
    %vm987 = vcmp.lt.s32.totalorder %v966, 3
    %vm988 = vcmp.lt.s32.totalorder %v966, 4
    %v989 = vsel %vm985, %v969, %v972
    %v990 = vsel %vm988, %v978, 2102212464
    %v991 = vsel %vm987, %v975, %v990
    %v992 = vsel %vm986, %v989, %v991
    %v993 = vsel %vm985, %v972, %v975
    %v994 = vsel %vm988, %v981, 920167782
    %v995 = vsel %vm987, %v978, %v994
    %v996 = vsel %vm986, %v993, %v995
    %v997 = vsel %vm985, %v975, %v978
    %v998 = vsel %vm988, %v984, 1326507024
    %v999 = vsel %vm987, %v981, %v998
    %v1000 = vsel %vm986, %v997, %v999
    %v1001 = vshll.u32 %v961, 8
    %v1002 = vmul.u32.u64.compose %v1001, %v1000
    %v1003 = vextract.low.u32 %v1002
    %v1004 = vextract.high.u32 %v1002
    %v1005 = vmul.u32.u64.compose %v1001, %v996
    %v1006 = vextract.low.u32 %v1005
    %v1007 = vextract.high.u32 %v1005
    %v1008 = vmul.u32 %v1001, %v992
    %v1009 = vadd.s32 %v1004, %v1006
    %vm1010 = vc.u32 %v1004, %v1006
    %v1011 = vadd.s32 %v1007, 1
    %v1012 = vsel %vm1010, %v1011, %v1007
    %v1013 = vadd.s32 %v1008, %v1012
    %v1014 = vadd.s32 %v1013, 536870912
    %v1015 = vshrl.u32 %v1014, 30
    %v1016 = vshll.u32 %v1015, 30
    %v1017 = vsub.s32 %v1013, %v1016
    %vm1018 = vcmp.lt.s32.totalorder %v1017, 0
    %v1019 = vsub.s32 0, %v1017
    %v1020 = vsel %vm1018, %v1019, %v1017
    %v1021 = vclz %v1020
    %v1022 = vsub.s32 %v1021, 2
    %vm1023 = vcmp.gt.s32.totalorder 0, %v1022
    %v1024 = vsel %vm1023, 0, %v1022
    %v1025 = vsub.s32 32, %v1024
    %v1026 = vshll.u32 %v1017, %v1024
    %v1027 = vshrl.u32 %v1009, %v1025
    %v1028 = vor.u32 %v1026, %v1027
    %v1029 = vsub.s32 4294967266, %v1024
    %v1030 = vadd.s32 %v1029, 127
    %v1031 = vshll.u32 %v1030, 23
    %v1032 = vor.u32 4788187, %v1031
    %v1033 = vand.u32 2147483647, %v1032
    %v1035 = vcvt.s32.f32 %v1028
    %v1036 = vmul.f32 %v1035, %v1033
    %v1037 = vxor.u32 %v1036, 2147483648
    %v1038 = vsel %vm955, %v1037, %v1036
    %v1039 = vsub.s32 4, %v1015
    %v1040 = vsel %vm955, %v1039, %v1015
    %v1041 = vsel %vm954, %v113, %v1038
    %v1042 = vsel %vm954, 0, %v1040
    %v1043 = vcosq.f32.pop %v1041
    %v1044 = vsinq.f32.pop %v1041
    %vm1045 = vweird.f32 %v113
    %v1046 = vadd.s32 %v1042, 3
    %v1047 = vand.u32 %v1046, 3
    %vm1048 = vcmp.lt.s32.totalorder %v1047, 2
    %vm1049 = vcmp.eq.s32.totalorder %v1047, 0
    %v1050 = vxor.u32 %v1044, 2147483648
    %v1051 = vsel %vm1049, %v1043, %v1050
    %vm1052 = vcmp.eq.s32.totalorder %v1047, 2
    %v1053 = vxor.u32 %v1043, 2147483648
    %v1054 = vsel %vm1052, %v1053, %v1044
    %v1055 = vsel %vm1048, %v1051, %v1054
    %v1056 = vsel %vm1045, nan, %v1055
    %v1057 = vand.u32 2147483647, %v114
    %vm1058 = vcmp.le.f32.partialorder %v1057, 0.7853982
    %vm1059 = vcmp.lt.s32.totalorder %v114, 0
    %v1060 = vand.u32 %v114, 2139095040
    %v1061 = vshrl.u32 %v1060, 23
    %v1062 = vsub.s32 %v1061, 127
    %v1063 = vand.u32 2147483647, %v114
    %v1064 = vand.u32 %v1063, 8388607
    %v1065 = vor.u32 %v1064, 8388608
    %v1066 = vsub.s32 0, %v1065
    %v1067 = vadd.s32 %v1062, 1
    %vm1068 = vcmp.gt.s32.totalorder %v1067, 0
    %v1069 = vsel %vm1068, %v1067, 0
    %v1070 = vshrl.u32 %v1069, 5
    %v1071 = vand.u32 %v1069, 31
    %v1072 = vsub.s32 32, %v1071
    %v1073 = vshrl.u32 683565275, %v1072
    %v1074 = vshll.u32 683565275, %v1071
    %v1075 = vshrl.u32 2475754826, %v1072
    %v1076 = vor.u32 %v1074, %v1075
    %v1077 = vshll.u32 2475754826, %v1071
    %v1078 = vshrl.u32 2131351028, %v1072
    %v1079 = vor.u32 %v1077, %v1078
    %v1080 = vshll.u32 2131351028, %v1071
    %v1081 = vshrl.u32 2102212464, %v1072
    %v1082 = vor.u32 %v1080, %v1081
    %v1083 = vshll.u32 2102212464, %v1071
    %v1084 = vshrl.u32 920167782, %v1072
    %v1085 = vor.u32 %v1083, %v1084
    %v1086 = vshll.u32 920167782, %v1071
    %v1087 = vshrl.u32 1326507024, %v1072
    %v1088 = vor.u32 %v1086, %v1087
    %vm1089 = vcmp.lt.s32.totalorder %v1070, 1
    %vm1090 = vcmp.lt.s32.totalorder %v1070, 2
    %vm1091 = vcmp.lt.s32.totalorder %v1070, 3
    %vm1092 = vcmp.lt.s32.totalorder %v1070, 4
    %v1093 = vsel %vm1089, %v1073, %v1076
    %v1094 = vsel %vm1092, %v1082, 2102212464
    %v1095 = vsel %vm1091, %v1079, %v1094
    %v1096 = vsel %vm1090, %v1093, %v1095
    %v1097 = vsel %vm1089, %v1076, %v1079
    %v1098 = vsel %vm1092, %v1085, 920167782
    %v1099 = vsel %vm1091, %v1082, %v1098
    %v1100 = vsel %vm1090, %v1097, %v1099
    %v1101 = vsel %vm1089, %v1079, %v1082
    %v1102 = vsel %vm1092, %v1088, 1326507024
    %v1103 = vsel %vm1091, %v1085, %v1102
    %v1104 = vsel %vm1090, %v1101, %v1103
    %v1105 = vshll.u32 %v1065, 8
    %v1106 = vmul.u32.u64.compose %v1105, %v1104
    %v1107 = vextract.low.u32 %v1106
    %v1108 = vextract.high.u32 %v1106
    %v1109 = vmul.u32.u64.compose %v1105, %v1100
    %v1110 = vextract.low.u32 %v1109
    %v1111 = vextract.high.u32 %v1109
    %v1112 = vmul.u32 %v1105, %v1096
    %v1113 = vadd.s32 %v1108, %v1110
    %vm1114 = vc.u32 %v1108, %v1110
    %v1115 = vadd.s32 %v1111, 1
    %v1116 = vsel %vm1114, %v1115, %v1111
    %v1117 = vadd.s32 %v1112, %v1116
    %v1118 = vadd.s32 %v1117, 536870912
    %v1119 = vshrl.u32 %v1118, 30
    %v1120 = vshll.u32 %v1119, 30
    %v1121 = vsub.s32 %v1117, %v1120
    %vm1122 = vcmp.lt.s32.totalorder %v1121, 0
    %v1123 = vsub.s32 0, %v1121
    %v1124 = vsel %vm1122, %v1123, %v1121
    %v1125 = vclz %v1124
    %v1126 = vsub.s32 %v1125, 2
    %vm1127 = vcmp.gt.s32.totalorder 0, %v1126
    %v1128 = vsel %vm1127, 0, %v1126
    %v1129 = vsub.s32 32, %v1128
    %v1130 = vshll.u32 %v1121, %v1128
    %v1131 = vshrl.u32 %v1113, %v1129
    %v1132 = vor.u32 %v1130, %v1131
    %v1133 = vsub.s32 4294967266, %v1128
    %v1134 = vadd.s32 %v1133, 127
    %v1135 = vshll.u32 %v1134, 23
    %v1136 = vor.u32 4788187, %v1135
    %v1137 = vand.u32 2147483647, %v1136
    %v1139 = vcvt.s32.f32 %v1132
    %v1140 = vmul.f32 %v1139, %v1137
    %v1141 = vxor.u32 %v1140, 2147483648
    %v1142 = vsel %vm1059, %v1141, %v1140
    %v1143 = vsub.s32 4, %v1119
    %v1144 = vsel %vm1059, %v1143, %v1119
    %v1145 = vsel %vm1058, %v114, %v1142
    %v1146 = vsel %vm1058, 0, %v1144
    %v1147 = vcosq.f32.pop %v1145
    %v1148 = vsinq.f32.pop %v1145
    %vm1149 = vweird.f32 %v114
    %v1150 = vadd.s32 %v1146, 3
    %v1151 = vand.u32 %v1150, 3
    %vm1152 = vcmp.lt.s32.totalorder %v1151, 2
    %vm1153 = vcmp.eq.s32.totalorder %v1151, 0
    %v1154 = vxor.u32 %v1148, 2147483648
    %v1155 = vsel %vm1153, %v1147, %v1154
    %vm1156 = vcmp.eq.s32.totalorder %v1151, 2
    %v1157 = vxor.u32 %v1147, 2147483648
    %v1158 = vsel %vm1156, %v1157, %v1148
    %v1159 = vsel %vm1152, %v1155, %v1158
    %v1160 = vsel %vm1149, nan, %v1159
    %v1161 = vand.u32 2147483647, %v115
    %vm1162 = vcmp.le.f32.partialorder %v1161, 0.7853982
    %vm1163 = vcmp.lt.s32.totalorder %v115, 0
    %v1164 = vand.u32 %v115, 2139095040
    %v1165 = vshrl.u32 %v1164, 23
    %v1166 = vsub.s32 %v1165, 127
    %v1167 = vand.u32 2147483647, %v115
    %v1168 = vand.u32 %v1167, 8388607
    %v1169 = vor.u32 %v1168, 8388608
    %v1170 = vsub.s32 0, %v1169
    %v1171 = vadd.s32 %v1166, 1
    %vm1172 = vcmp.gt.s32.totalorder %v1171, 0
    %v1173 = vsel %vm1172, %v1171, 0
    %v1174 = vshrl.u32 %v1173, 5
    %v1175 = vand.u32 %v1173, 31
    %v1176 = vsub.s32 32, %v1175
    %v1177 = vshrl.u32 683565275, %v1176
    %v1178 = vshll.u32 683565275, %v1175
    %v1179 = vshrl.u32 2475754826, %v1176
    %v1180 = vor.u32 %v1178, %v1179
    %v1181 = vshll.u32 2475754826, %v1175
    %v1182 = vshrl.u32 2131351028, %v1176
    %v1183 = vor.u32 %v1181, %v1182
    %v1184 = vshll.u32 2131351028, %v1175
    %v1185 = vshrl.u32 2102212464, %v1176
    %v1186 = vor.u32 %v1184, %v1185
    %v1187 = vshll.u32 2102212464, %v1175
    %v1188 = vshrl.u32 920167782, %v1176
    %v1189 = vor.u32 %v1187, %v1188
    %v1190 = vshll.u32 920167782, %v1175
    %v1191 = vshrl.u32 1326507024, %v1176
    %v1192 = vor.u32 %v1190, %v1191
    %vm1193 = vcmp.lt.s32.totalorder %v1174, 1
    %vm1194 = vcmp.lt.s32.totalorder %v1174, 2
    %vm1195 = vcmp.lt.s32.totalorder %v1174, 3
    %vm1196 = vcmp.lt.s32.totalorder %v1174, 4
    %v1197 = vsel %vm1193, %v1177, %v1180
    %v1198 = vsel %vm1196, %v1186, 2102212464
    %v1199 = vsel %vm1195, %v1183, %v1198
    %v1200 = vsel %vm1194, %v1197, %v1199
    %v1201 = vsel %vm1193, %v1180, %v1183
    %v1202 = vsel %vm1196, %v1189, 920167782
    %v1203 = vsel %vm1195, %v1186, %v1202
    %v1204 = vsel %vm1194, %v1201, %v1203
    %v1205 = vsel %vm1193, %v1183, %v1186
    %v1206 = vsel %vm1196, %v1192, 1326507024
    %v1207 = vsel %vm1195, %v1189, %v1206
    %v1208 = vsel %vm1194, %v1205, %v1207
    %v1209 = vshll.u32 %v1169, 8
    %v1210 = vmul.u32.u64.compose %v1209, %v1208
    %v1211 = vextract.low.u32 %v1210
    %v1212 = vextract.high.u32 %v1210
    %v1213 = vmul.u32.u64.compose %v1209, %v1204
    %v1214 = vextract.low.u32 %v1213
    %v1215 = vextract.high.u32 %v1213
    %v1216 = vmul.u32 %v1209, %v1200
    %v1217 = vadd.s32 %v1212, %v1214
    %vm1218 = vc.u32 %v1212, %v1214
    %v1219 = vadd.s32 %v1215, 1
    %v1220 = vsel %vm1218, %v1219, %v1215
    %v1221 = vadd.s32 %v1216, %v1220
    %v1222 = vadd.s32 %v1221, 536870912
    %v1223 = vshrl.u32 %v1222, 30
    %v1224 = vshll.u32 %v1223, 30
    %v1225 = vsub.s32 %v1221, %v1224
    %vm1226 = vcmp.lt.s32.totalorder %v1225, 0
    %v1227 = vsub.s32 0, %v1225
    %v1228 = vsel %vm1226, %v1227, %v1225
    %v1229 = vclz %v1228
    %v1230 = vsub.s32 %v1229, 2
    %vm1231 = vcmp.gt.s32.totalorder 0, %v1230
    %v1232 = vsel %vm1231, 0, %v1230
    %v1233 = vsub.s32 32, %v1232
    %v1234 = vshll.u32 %v1225, %v1232
    %v1235 = vshrl.u32 %v1217, %v1233
    %v1236 = vor.u32 %v1234, %v1235
    %v1237 = vsub.s32 4294967266, %v1232
    %v1238 = vadd.s32 %v1237, 127
    %v1239 = vshll.u32 %v1238, 23
    %v1240 = vor.u32 4788187, %v1239
    %v1241 = vand.u32 2147483647, %v1240
    %v1243 = vcvt.s32.f32 %v1236
    %v1244 = vmul.f32 %v1243, %v1241
    %v1245 = vxor.u32 %v1244, 2147483648
    %v1246 = vsel %vm1163, %v1245, %v1244
    %v1247 = vsub.s32 4, %v1223
    %v1248 = vsel %vm1163, %v1247, %v1223
    %v1249 = vsel %vm1162, %v115, %v1246
    %v1250 = vsel %vm1162, 0, %v1248
    %v1251 = vcosq.f32.pop %v1249
    %v1252 = vsinq.f32.pop %v1249
    %vm1253 = vweird.f32 %v115
    %v1254 = vadd.s32 %v1250, 3
    %v1255 = vand.u32 %v1254, 3
    %vm1256 = vcmp.lt.s32.totalorder %v1255, 2
    %vm1257 = vcmp.eq.s32.totalorder %v1255, 0
    %v1258 = vxor.u32 %v1252, 2147483648
    %v1259 = vsel %vm1257, %v1251, %v1258
    %vm1260 = vcmp.eq.s32.totalorder %v1255, 2
    %v1261 = vxor.u32 %v1251, 2147483648
    %v1262 = vsel %vm1260, %v1261, %v1252
    %v1263 = vsel %vm1256, %v1259, %v1262
    %v1264 = vsel %vm1253, nan, %v1263
    %v1265 = vand.u32 2147483647, %v116
    %vm1266 = vcmp.le.f32.partialorder %v1265, 0.7853982
    %vm1267 = vcmp.lt.s32.totalorder %v116, 0
    %v1268 = vand.u32 %v116, 2139095040
    %v1269 = vshrl.u32 %v1268, 23
    %v1270 = vsub.s32 %v1269, 127
    %v1271 = vand.u32 2147483647, %v116
    %v1272 = vand.u32 %v1271, 8388607
    %v1273 = vor.u32 %v1272, 8388608
    %v1274 = vsub.s32 0, %v1273
    %v1275 = vadd.s32 %v1270, 1
    %vm1276 = vcmp.gt.s32.totalorder %v1275, 0
    %v1277 = vsel %vm1276, %v1275, 0
    %v1278 = vshrl.u32 %v1277, 5
    %v1279 = vand.u32 %v1277, 31
    %v1280 = vsub.s32 32, %v1279
    %v1281 = vshrl.u32 683565275, %v1280
    %v1282 = vshll.u32 683565275, %v1279
    %v1283 = vshrl.u32 2475754826, %v1280
    %v1284 = vor.u32 %v1282, %v1283
    %v1285 = vshll.u32 2475754826, %v1279
    %v1286 = vshrl.u32 2131351028, %v1280
    %v1287 = vor.u32 %v1285, %v1286
    %v1288 = vshll.u32 2131351028, %v1279
    %v1289 = vshrl.u32 2102212464, %v1280
    %v1290 = vor.u32 %v1288, %v1289
    %v1291 = vshll.u32 2102212464, %v1279
    %v1292 = vshrl.u32 920167782, %v1280
    %v1293 = vor.u32 %v1291, %v1292
    %v1294 = vshll.u32 920167782, %v1279
    %v1295 = vshrl.u32 1326507024, %v1280
    %v1296 = vor.u32 %v1294, %v1295
    %vm1297 = vcmp.lt.s32.totalorder %v1278, 1
    %vm1298 = vcmp.lt.s32.totalorder %v1278, 2
    %vm1299 = vcmp.lt.s32.totalorder %v1278, 3
    %vm1300 = vcmp.lt.s32.totalorder %v1278, 4
    %v1301 = vsel %vm1297, %v1281, %v1284
    %v1302 = vsel %vm1300, %v1290, 2102212464
    %v1303 = vsel %vm1299, %v1287, %v1302
    %v1304 = vsel %vm1298, %v1301, %v1303
    %v1305 = vsel %vm1297, %v1284, %v1287
    %v1306 = vsel %vm1300, %v1293, 920167782
    %v1307 = vsel %vm1299, %v1290, %v1306
    %v1308 = vsel %vm1298, %v1305, %v1307
    %v1309 = vsel %vm1297, %v1287, %v1290
    %v1310 = vsel %vm1300, %v1296, 1326507024
    %v1311 = vsel %vm1299, %v1293, %v1310
    %v1312 = vsel %vm1298, %v1309, %v1311
    %v1313 = vshll.u32 %v1273, 8
    %v1314 = vmul.u32.u64.compose %v1313, %v1312
    %v1315 = vextract.low.u32 %v1314
    %v1316 = vextract.high.u32 %v1314
    %v1317 = vmul.u32.u64.compose %v1313, %v1308
    %v1318 = vextract.low.u32 %v1317
    %v1319 = vextract.high.u32 %v1317
    %v1320 = vmul.u32 %v1313, %v1304
    %v1321 = vadd.s32 %v1316, %v1318
    %vm1322 = vc.u32 %v1316, %v1318
    %v1323 = vadd.s32 %v1319, 1
    %v1324 = vsel %vm1322, %v1323, %v1319
    %v1325 = vadd.s32 %v1320, %v1324
    %v1326 = vadd.s32 %v1325, 536870912
    %v1327 = vshrl.u32 %v1326, 30
    %v1328 = vshll.u32 %v1327, 30
    %v1329 = vsub.s32 %v1325, %v1328
    %vm1330 = vcmp.lt.s32.totalorder %v1329, 0
    %v1331 = vsub.s32 0, %v1329
    %v1332 = vsel %vm1330, %v1331, %v1329
    %v1333 = vclz %v1332
    %v1334 = vsub.s32 %v1333, 2
    %vm1335 = vcmp.gt.s32.totalorder 0, %v1334
    %v1336 = vsel %vm1335, 0, %v1334
    %v1337 = vsub.s32 32, %v1336
    %v1338 = vshll.u32 %v1329, %v1336
    %v1339 = vshrl.u32 %v1321, %v1337
    %v1340 = vor.u32 %v1338, %v1339
    %v1341 = vsub.s32 4294967266, %v1336
    %v1342 = vadd.s32 %v1341, 127
    %v1343 = vshll.u32 %v1342, 23
    %v1344 = vor.u32 4788187, %v1343
    %v1345 = vand.u32 2147483647, %v1344
    %v1347 = vcvt.s32.f32 %v1340
    %v1348 = vmul.f32 %v1347, %v1345
    %v1349 = vxor.u32 %v1348, 2147483648
    %v1350 = vsel %vm1267, %v1349, %v1348
    %v1351 = vsub.s32 4, %v1327
    %v1352 = vsel %vm1267, %v1351, %v1327
    %v1353 = vsel %vm1266, %v116, %v1350
    %v1354 = vsel %vm1266, 0, %v1352
    %v1355 = vcosq.f32.pop %v1353
    %v1356 = vsinq.f32.pop %v1353
    %vm1357 = vweird.f32 %v116
    %v1358 = vadd.s32 %v1354, 3
    %v1359 = vand.u32 %v1358, 3
    %vm1360 = vcmp.lt.s32.totalorder %v1359, 2
    %vm1361 = vcmp.eq.s32.totalorder %v1359, 0
    %v1362 = vxor.u32 %v1356, 2147483648
    %v1363 = vsel %vm1361, %v1355, %v1362
    %vm1364 = vcmp.eq.s32.totalorder %v1359, 2
    %v1365 = vxor.u32 %v1355, 2147483648
    %v1366 = vsel %vm1364, %v1365, %v1356
    %v1367 = vsel %vm1360, %v1363, %v1366
    %v1368 = vsel %vm1357, nan, %v1367
    %v1369 = vand.u32 2147483647, %v117
    %vm1370 = vcmp.le.f32.partialorder %v1369, 0.7853982
    %vm1371 = vcmp.lt.s32.totalorder %v117, 0
    %v1372 = vand.u32 %v117, 2139095040
    %v1373 = vshrl.u32 %v1372, 23
    %v1374 = vsub.s32 %v1373, 127
    %v1375 = vand.u32 2147483647, %v117
    %v1376 = vand.u32 %v1375, 8388607
    %v1377 = vor.u32 %v1376, 8388608
    %v1378 = vsub.s32 0, %v1377
    %v1379 = vadd.s32 %v1374, 1
    %vm1380 = vcmp.gt.s32.totalorder %v1379, 0
    %v1381 = vsel %vm1380, %v1379, 0
    %v1382 = vshrl.u32 %v1381, 5
    %v1383 = vand.u32 %v1381, 31
    %v1384 = vsub.s32 32, %v1383
    %v1385 = vshrl.u32 683565275, %v1384
    %v1386 = vshll.u32 683565275, %v1383
    %v1387 = vshrl.u32 2475754826, %v1384
    %v1388 = vor.u32 %v1386, %v1387
    %v1389 = vshll.u32 2475754826, %v1383
    %v1390 = vshrl.u32 2131351028, %v1384
    %v1391 = vor.u32 %v1389, %v1390
    %v1392 = vshll.u32 2131351028, %v1383
    %v1393 = vshrl.u32 2102212464, %v1384
    %v1394 = vor.u32 %v1392, %v1393
    %v1395 = vshll.u32 2102212464, %v1383
    %v1396 = vshrl.u32 920167782, %v1384
    %v1397 = vor.u32 %v1395, %v1396
    %v1398 = vshll.u32 920167782, %v1383
    %v1399 = vshrl.u32 1326507024, %v1384
    %v1400 = vor.u32 %v1398, %v1399
    %vm1401 = vcmp.lt.s32.totalorder %v1382, 1
    %vm1402 = vcmp.lt.s32.totalorder %v1382, 2
    %vm1403 = vcmp.lt.s32.totalorder %v1382, 3
    %vm1404 = vcmp.lt.s32.totalorder %v1382, 4
    %v1405 = vsel %vm1401, %v1385, %v1388
    %v1406 = vsel %vm1404, %v1394, 2102212464
    %v1407 = vsel %vm1403, %v1391, %v1406
    %v1408 = vsel %vm1402, %v1405, %v1407
    %v1409 = vsel %vm1401, %v1388, %v1391
    %v1410 = vsel %vm1404, %v1397, 920167782
    %v1411 = vsel %vm1403, %v1394, %v1410
    %v1412 = vsel %vm1402, %v1409, %v1411
    %v1413 = vsel %vm1401, %v1391, %v1394
    %v1414 = vsel %vm1404, %v1400, 1326507024
    %v1415 = vsel %vm1403, %v1397, %v1414
    %v1416 = vsel %vm1402, %v1413, %v1415
    %v1417 = vshll.u32 %v1377, 8
    %v1418 = vmul.u32.u64.compose %v1417, %v1416
    %v1419 = vextract.low.u32 %v1418
    %v1420 = vextract.high.u32 %v1418
    %v1421 = vmul.u32.u64.compose %v1417, %v1412
    %v1422 = vextract.low.u32 %v1421
    %v1423 = vextract.high.u32 %v1421
    %v1424 = vmul.u32 %v1417, %v1408
    %v1425 = vadd.s32 %v1420, %v1422
    %vm1426 = vc.u32 %v1420, %v1422
    %v1427 = vadd.s32 %v1423, 1
    %v1428 = vsel %vm1426, %v1427, %v1423
    %v1429 = vadd.s32 %v1424, %v1428
    %v1430 = vadd.s32 %v1429, 536870912
    %v1431 = vshrl.u32 %v1430, 30
    %v1432 = vshll.u32 %v1431, 30
    %v1433 = vsub.s32 %v1429, %v1432
    %vm1434 = vcmp.lt.s32.totalorder %v1433, 0
    %v1435 = vsub.s32 0, %v1433
    %v1436 = vsel %vm1434, %v1435, %v1433
    %v1437 = vclz %v1436
    %v1438 = vsub.s32 %v1437, 2
    %vm1439 = vcmp.gt.s32.totalorder 0, %v1438
    %v1440 = vsel %vm1439, 0, %v1438
    %v1441 = vsub.s32 32, %v1440
    %v1442 = vshll.u32 %v1433, %v1440
    %v1443 = vshrl.u32 %v1425, %v1441
    %v1444 = vor.u32 %v1442, %v1443
    %v1445 = vsub.s32 4294967266, %v1440
    %v1446 = vadd.s32 %v1445, 127
    %v1447 = vshll.u32 %v1446, 23
    %v1448 = vor.u32 4788187, %v1447
    %v1449 = vand.u32 2147483647, %v1448
    %v1451 = vcvt.s32.f32 %v1444
    %v1452 = vmul.f32 %v1451, %v1449
    %v1453 = vxor.u32 %v1452, 2147483648
    %v1454 = vsel %vm1371, %v1453, %v1452
    %v1455 = vsub.s32 4, %v1431
    %v1456 = vsel %vm1371, %v1455, %v1431
    %v1457 = vsel %vm1370, %v117, %v1454
    %v1458 = vsel %vm1370, 0, %v1456
    %v1459 = vcosq.f32.pop %v1457
    %v1460 = vsinq.f32.pop %v1457
    %vm1461 = vweird.f32 %v117
    %v1462 = vadd.s32 %v1458, 3
    %v1463 = vand.u32 %v1462, 3
    %vm1464 = vcmp.lt.s32.totalorder %v1463, 2
    %vm1465 = vcmp.eq.s32.totalorder %v1463, 0
    %v1466 = vxor.u32 %v1460, 2147483648
    %v1467 = vsel %vm1465, %v1459, %v1466
    %vm1468 = vcmp.eq.s32.totalorder %v1463, 2
    %v1469 = vxor.u32 %v1459, 2147483648
    %v1470 = vsel %vm1468, %v1469, %v1460
    %v1471 = vsel %vm1464, %v1467, %v1470
    %v1472 = vsel %vm1461, nan, %v1471
    %v1473 = vand.u32 2147483647, %v118
    %vm1474 = vcmp.le.f32.partialorder %v1473, 0.7853982
    %vm1475 = vcmp.lt.s32.totalorder %v118, 0
    %v1476 = vand.u32 %v118, 2139095040
    %v1477 = vshrl.u32 %v1476, 23
    %v1478 = vsub.s32 %v1477, 127
    %v1479 = vand.u32 2147483647, %v118
    %v1480 = vand.u32 %v1479, 8388607
    %v1481 = vor.u32 %v1480, 8388608
    %v1482 = vsub.s32 0, %v1481
    %v1483 = vadd.s32 %v1478, 1
    %vm1484 = vcmp.gt.s32.totalorder %v1483, 0
    %v1485 = vsel %vm1484, %v1483, 0
    %v1486 = vshrl.u32 %v1485, 5
    %v1487 = vand.u32 %v1485, 31
    %v1488 = vsub.s32 32, %v1487
    %v1489 = vshrl.u32 683565275, %v1488
    %v1490 = vshll.u32 683565275, %v1487
    %v1491 = vshrl.u32 2475754826, %v1488
    %v1492 = vor.u32 %v1490, %v1491
    %v1493 = vshll.u32 2475754826, %v1487
    %v1494 = vshrl.u32 2131351028, %v1488
    %v1495 = vor.u32 %v1493, %v1494
    %v1496 = vshll.u32 2131351028, %v1487
    %v1497 = vshrl.u32 2102212464, %v1488
    %v1498 = vor.u32 %v1496, %v1497
    %v1499 = vshll.u32 2102212464, %v1487
    %v1500 = vshrl.u32 920167782, %v1488
    %v1501 = vor.u32 %v1499, %v1500
    %v1502 = vshll.u32 920167782, %v1487
    %v1503 = vshrl.u32 1326507024, %v1488
    %v1504 = vor.u32 %v1502, %v1503
    %vm1505 = vcmp.lt.s32.totalorder %v1486, 1
    %vm1506 = vcmp.lt.s32.totalorder %v1486, 2
    %vm1507 = vcmp.lt.s32.totalorder %v1486, 3
    %vm1508 = vcmp.lt.s32.totalorder %v1486, 4
    %v1509 = vsel %vm1505, %v1489, %v1492
    %v1510 = vsel %vm1508, %v1498, 2102212464
    %v1511 = vsel %vm1507, %v1495, %v1510
    %v1512 = vsel %vm1506, %v1509, %v1511
    %v1513 = vsel %vm1505, %v1492, %v1495
    %v1514 = vsel %vm1508, %v1501, 920167782
    %v1515 = vsel %vm1507, %v1498, %v1514
    %v1516 = vsel %vm1506, %v1513, %v1515
    %v1517 = vsel %vm1505, %v1495, %v1498
    %v1518 = vsel %vm1508, %v1504, 1326507024
    %v1519 = vsel %vm1507, %v1501, %v1518
    %v1520 = vsel %vm1506, %v1517, %v1519
    %v1521 = vshll.u32 %v1481, 8
    %v1522 = vmul.u32.u64.compose %v1521, %v1520
    %v1523 = vextract.low.u32 %v1522
    %v1524 = vextract.high.u32 %v1522
    %v1525 = vmul.u32.u64.compose %v1521, %v1516
    %v1526 = vextract.low.u32 %v1525
    %v1527 = vextract.high.u32 %v1525
    %v1528 = vmul.u32 %v1521, %v1512
    %v1529 = vadd.s32 %v1524, %v1526
    %vm1530 = vc.u32 %v1524, %v1526
    %v1531 = vadd.s32 %v1527, 1
    %v1532 = vsel %vm1530, %v1531, %v1527
    %v1533 = vadd.s32 %v1528, %v1532
    %v1534 = vadd.s32 %v1533, 536870912
    %v1535 = vshrl.u32 %v1534, 30
    %v1536 = vshll.u32 %v1535, 30
    %v1537 = vsub.s32 %v1533, %v1536
    %vm1538 = vcmp.lt.s32.totalorder %v1537, 0
    %v1539 = vsub.s32 0, %v1537
    %v1540 = vsel %vm1538, %v1539, %v1537
    %v1541 = vclz %v1540
    %v1542 = vsub.s32 %v1541, 2
    %vm1543 = vcmp.gt.s32.totalorder 0, %v1542
    %v1544 = vsel %vm1543, 0, %v1542
    %v1545 = vsub.s32 32, %v1544
    %v1546 = vshll.u32 %v1537, %v1544
    %v1547 = vshrl.u32 %v1529, %v1545
    %v1548 = vor.u32 %v1546, %v1547
    %v1549 = vsub.s32 4294967266, %v1544
    %v1550 = vadd.s32 %v1549, 127
    %v1551 = vshll.u32 %v1550, 23
    %v1552 = vor.u32 4788187, %v1551
    %v1553 = vand.u32 2147483647, %v1552
    %v1555 = vcvt.s32.f32 %v1548
    %v1556 = vmul.f32 %v1555, %v1553
    %v1557 = vxor.u32 %v1556, 2147483648
    %v1558 = vsel %vm1475, %v1557, %v1556
    %v1559 = vsub.s32 4, %v1535
    %v1560 = vsel %vm1475, %v1559, %v1535
    %v1561 = vsel %vm1474, %v118, %v1558
    %v1562 = vsel %vm1474, 0, %v1560
    %v1563 = vcosq.f32.pop %v1561
    %v1564 = vsinq.f32.pop %v1561
    %vm1565 = vweird.f32 %v118
    %v1566 = vadd.s32 %v1562, 3
    %v1567 = vand.u32 %v1566, 3
    %vm1568 = vcmp.lt.s32.totalorder %v1567, 2
    %vm1569 = vcmp.eq.s32.totalorder %v1567, 0
    %v1570 = vxor.u32 %v1564, 2147483648
    %v1571 = vsel %vm1569, %v1563, %v1570
    %vm1572 = vcmp.eq.s32.totalorder %v1567, 2
    %v1573 = vxor.u32 %v1563, 2147483648
    %v1574 = vsel %vm1572, %v1573, %v1564
    %v1575 = vsel %vm1568, %v1571, %v1574
    %v1576 = vsel %vm1565, nan, %v1575
    %v1577 = vand.u32 2147483647, %v119
    %vm1578 = vcmp.le.f32.partialorder %v1577, 0.7853982
    %vm1579 = vcmp.lt.s32.totalorder %v119, 0
    %v1580 = vand.u32 %v119, 2139095040
    %v1581 = vshrl.u32 %v1580, 23
    %v1582 = vsub.s32 %v1581, 127
    %v1583 = vand.u32 2147483647, %v119
    %v1584 = vand.u32 %v1583, 8388607
    %v1585 = vor.u32 %v1584, 8388608
    %v1586 = vsub.s32 0, %v1585
    %v1587 = vadd.s32 %v1582, 1
    %vm1588 = vcmp.gt.s32.totalorder %v1587, 0
    %v1589 = vsel %vm1588, %v1587, 0
    %v1590 = vshrl.u32 %v1589, 5
    %v1591 = vand.u32 %v1589, 31
    %v1592 = vsub.s32 32, %v1591
    %v1593 = vshrl.u32 683565275, %v1592
    %v1594 = vshll.u32 683565275, %v1591
    %v1595 = vshrl.u32 2475754826, %v1592
    %v1596 = vor.u32 %v1594, %v1595
    %v1597 = vshll.u32 2475754826, %v1591
    %v1598 = vshrl.u32 2131351028, %v1592
    %v1599 = vor.u32 %v1597, %v1598
    %v1600 = vshll.u32 2131351028, %v1591
    %v1601 = vshrl.u32 2102212464, %v1592
    %v1602 = vor.u32 %v1600, %v1601
    %v1603 = vshll.u32 2102212464, %v1591
    %v1604 = vshrl.u32 920167782, %v1592
    %v1605 = vor.u32 %v1603, %v1604
    %v1606 = vshll.u32 920167782, %v1591
    %v1607 = vshrl.u32 1326507024, %v1592
    %v1608 = vor.u32 %v1606, %v1607
    %vm1609 = vcmp.lt.s32.totalorder %v1590, 1
    %vm1610 = vcmp.lt.s32.totalorder %v1590, 2
    %vm1611 = vcmp.lt.s32.totalorder %v1590, 3
    %vm1612 = vcmp.lt.s32.totalorder %v1590, 4
    %v1613 = vsel %vm1609, %v1593, %v1596
    %v1614 = vsel %vm1612, %v1602, 2102212464
    %v1615 = vsel %vm1611, %v1599, %v1614
    %v1616 = vsel %vm1610, %v1613, %v1615
    %v1617 = vsel %vm1609, %v1596, %v1599
    %v1618 = vsel %vm1612, %v1605, 920167782
    %v1619 = vsel %vm1611, %v1602, %v1618
    %v1620 = vsel %vm1610, %v1617, %v1619
    %v1621 = vsel %vm1609, %v1599, %v1602
    %v1622 = vsel %vm1612, %v1608, 1326507024
    %v1623 = vsel %vm1611, %v1605, %v1622
    %v1624 = vsel %vm1610, %v1621, %v1623
    %v1625 = vshll.u32 %v1585, 8
    %v1626 = vmul.u32.u64.compose %v1625, %v1624
    %v1627 = vextract.low.u32 %v1626
    %v1628 = vextract.high.u32 %v1626
    %v1629 = vmul.u32.u64.compose %v1625, %v1620
    %v1630 = vextract.low.u32 %v1629
    %v1631 = vextract.high.u32 %v1629
    %v1632 = vmul.u32 %v1625, %v1616
    %v1633 = vadd.s32 %v1628, %v1630
    %vm1634 = vc.u32 %v1628, %v1630
    %v1635 = vadd.s32 %v1631, 1
    %v1636 = vsel %vm1634, %v1635, %v1631
    %v1637 = vadd.s32 %v1632, %v1636
    %v1638 = vadd.s32 %v1637, 536870912
    %v1639 = vshrl.u32 %v1638, 30
    %v1640 = vshll.u32 %v1639, 30
    %v1641 = vsub.s32 %v1637, %v1640
    %vm1642 = vcmp.lt.s32.totalorder %v1641, 0
    %v1643 = vsub.s32 0, %v1641
    %v1644 = vsel %vm1642, %v1643, %v1641
    %v1645 = vclz %v1644
    %v1646 = vsub.s32 %v1645, 2
    %vm1647 = vcmp.gt.s32.totalorder 0, %v1646
    %v1648 = vsel %vm1647, 0, %v1646
    %v1649 = vsub.s32 32, %v1648
    %v1650 = vshll.u32 %v1641, %v1648
    %v1651 = vshrl.u32 %v1633, %v1649
    %v1652 = vor.u32 %v1650, %v1651
    %v1653 = vsub.s32 4294967266, %v1648
    %v1654 = vadd.s32 %v1653, 127
    %v1655 = vshll.u32 %v1654, 23
    %v1656 = vor.u32 4788187, %v1655
    %v1657 = vand.u32 2147483647, %v1656
    %v1659 = vcvt.s32.f32 %v1652
    %v1660 = vmul.f32 %v1659, %v1657
    %v1661 = vxor.u32 %v1660, 2147483648
    %v1662 = vsel %vm1579, %v1661, %v1660
    %v1663 = vsub.s32 4, %v1639
    %v1664 = vsel %vm1579, %v1663, %v1639
    %v1665 = vsel %vm1578, %v119, %v1662
    %v1666 = vsel %vm1578, 0, %v1664
    %v1667 = vcosq.f32.pop %v1665
    %v1668 = vsinq.f32.pop %v1665
    %vm1669 = vweird.f32 %v119
    %v1670 = vadd.s32 %v1666, 3
    %v1671 = vand.u32 %v1670, 3
    %vm1672 = vcmp.lt.s32.totalorder %v1671, 2
    %vm1673 = vcmp.eq.s32.totalorder %v1671, 0
    %v1674 = vxor.u32 %v1668, 2147483648
    %v1675 = vsel %vm1673, %v1667, %v1674
    %vm1676 = vcmp.eq.s32.totalorder %v1671, 2
    %v1677 = vxor.u32 %v1667, 2147483648
    %v1678 = vsel %vm1676, %v1677, %v1668
    %v1679 = vsel %vm1672, %v1675, %v1678
    %v1680 = vsel %vm1669, nan, %v1679
    %v1681 = vand.u32 2147483647, %v120
    %vm1682 = vcmp.le.f32.partialorder %v1681, 0.7853982
    %vm1683 = vcmp.lt.s32.totalorder %v120, 0
    %v1684 = vand.u32 %v120, 2139095040
    %v1685 = vshrl.u32 %v1684, 23
    %v1686 = vsub.s32 %v1685, 127
    %v1687 = vand.u32 2147483647, %v120
    %v1688 = vand.u32 %v1687, 8388607
    %v1689 = vor.u32 %v1688, 8388608
    %v1690 = vsub.s32 0, %v1689
    %v1691 = vadd.s32 %v1686, 1
    %vm1692 = vcmp.gt.s32.totalorder %v1691, 0
    %v1693 = vsel %vm1692, %v1691, 0
    %v1694 = vshrl.u32 %v1693, 5
    %v1695 = vand.u32 %v1693, 31
    %v1696 = vsub.s32 32, %v1695
    %v1697 = vshrl.u32 683565275, %v1696
    %v1698 = vshll.u32 683565275, %v1695
    %v1699 = vshrl.u32 2475754826, %v1696
    %v1700 = vor.u32 %v1698, %v1699
    %v1701 = vshll.u32 2475754826, %v1695
    %v1702 = vshrl.u32 2131351028, %v1696
    %v1703 = vor.u32 %v1701, %v1702
    %v1704 = vshll.u32 2131351028, %v1695
    %v1705 = vshrl.u32 2102212464, %v1696
    %v1706 = vor.u32 %v1704, %v1705
    %v1707 = vshll.u32 2102212464, %v1695
    %v1708 = vshrl.u32 920167782, %v1696
    %v1709 = vor.u32 %v1707, %v1708
    %v1710 = vshll.u32 920167782, %v1695
    %v1711 = vshrl.u32 1326507024, %v1696
    %v1712 = vor.u32 %v1710, %v1711
    %vm1713 = vcmp.lt.s32.totalorder %v1694, 1
    %vm1714 = vcmp.lt.s32.totalorder %v1694, 2
    %vm1715 = vcmp.lt.s32.totalorder %v1694, 3
    %vm1716 = vcmp.lt.s32.totalorder %v1694, 4
    %v1717 = vsel %vm1713, %v1697, %v1700
    %v1718 = vsel %vm1716, %v1706, 2102212464
    %v1719 = vsel %vm1715, %v1703, %v1718
    %v1720 = vsel %vm1714, %v1717, %v1719
    %v1721 = vsel %vm1713, %v1700, %v1703
    %v1722 = vsel %vm1716, %v1709, 920167782
    %v1723 = vsel %vm1715, %v1706, %v1722
    %v1724 = vsel %vm1714, %v1721, %v1723
    %v1725 = vsel %vm1713, %v1703, %v1706
    %v1726 = vsel %vm1716, %v1712, 1326507024
    %v1727 = vsel %vm1715, %v1709, %v1726
    %v1728 = vsel %vm1714, %v1725, %v1727
    %v1729 = vshll.u32 %v1689, 8
    %v1730 = vmul.u32.u64.compose %v1729, %v1728
    %v1731 = vextract.low.u32 %v1730
    %v1732 = vextract.high.u32 %v1730
    %v1733 = vmul.u32.u64.compose %v1729, %v1724
    %v1734 = vextract.low.u32 %v1733
    %v1735 = vextract.high.u32 %v1733
    %v1736 = vmul.u32 %v1729, %v1720
    %v1737 = vadd.s32 %v1732, %v1734
    %vm1738 = vc.u32 %v1732, %v1734
    %v1739 = vadd.s32 %v1735, 1
    %v1740 = vsel %vm1738, %v1739, %v1735
    %v1741 = vadd.s32 %v1736, %v1740
    %v1742 = vadd.s32 %v1741, 536870912
    %v1743 = vshrl.u32 %v1742, 30
    %v1744 = vshll.u32 %v1743, 30
    %v1745 = vsub.s32 %v1741, %v1744
    %vm1746 = vcmp.lt.s32.totalorder %v1745, 0
    %v1747 = vsub.s32 0, %v1745
    %v1748 = vsel %vm1746, %v1747, %v1745
    %v1749 = vclz %v1748
    %v1750 = vsub.s32 %v1749, 2
    %vm1751 = vcmp.gt.s32.totalorder 0, %v1750
    %v1752 = vsel %vm1751, 0, %v1750
    %v1753 = vsub.s32 32, %v1752
    %v1754 = vshll.u32 %v1745, %v1752
    %v1755 = vshrl.u32 %v1737, %v1753
    %v1756 = vor.u32 %v1754, %v1755
    %v1757 = vsub.s32 4294967266, %v1752
    %v1758 = vadd.s32 %v1757, 127
    %v1759 = vshll.u32 %v1758, 23
    %v1760 = vor.u32 4788187, %v1759
    %v1761 = vand.u32 2147483647, %v1760
    %v1763 = vcvt.s32.f32 %v1756
    %v1764 = vmul.f32 %v1763, %v1761
    %v1765 = vxor.u32 %v1764, 2147483648
    %v1766 = vsel %vm1683, %v1765, %v1764
    %v1767 = vsub.s32 4, %v1743
    %v1768 = vsel %vm1683, %v1767, %v1743
    %v1769 = vsel %vm1682, %v120, %v1766
    %v1770 = vsel %vm1682, 0, %v1768
    %v1771 = vcosq.f32.pop %v1769
    %v1772 = vsinq.f32.pop %v1769
    %vm1773 = vweird.f32 %v120
    %v1774 = vadd.s32 %v1770, 3
    %v1775 = vand.u32 %v1774, 3
    %vm1776 = vcmp.lt.s32.totalorder %v1775, 2
    %vm1777 = vcmp.eq.s32.totalorder %v1775, 0
    %v1778 = vxor.u32 %v1772, 2147483648
    %v1779 = vsel %vm1777, %v1771, %v1778
    %vm1780 = vcmp.eq.s32.totalorder %v1775, 2
    %v1781 = vxor.u32 %v1771, 2147483648
    %v1782 = vsel %vm1780, %v1781, %v1772
    %v1783 = vsel %vm1776, %v1779, %v1782
    %v1784 = vsel %vm1773, nan, %v1783
    %1785 = vst [vmem:[#allocation5] sm:$0xff] %v224
    %1786 = vst [vmem:[#allocation5 + $0x8] sm:$0xff] %v328
    %1787 = vst [vmem:[#allocation5 + $0x10] sm:$0xff] %v432
    %1788 = vst [vmem:[#allocation5 + $0x18] sm:$0xff] %v536
    %1789 = vst [vmem:[#allocation5 + $0x20] sm:$0xff] %v640
    %1790 = vst [vmem:[#allocation5 + $0x28] sm:$0xff] %v744
    %1791 = vst [vmem:[#allocation5 + $0x30] sm:$0xff] %v848
    %1792 = vst [vmem:[#allocation5 + $0x38] sm:$0xff] %v952
    %1793 = vst [vmem:[#allocation5 + $0x40] sm:$0xff] %v1056
    %1794 = vst [vmem:[#allocation5 + $0x48] sm:$0xff] %v1160
    %1795 = vst [vmem:[#allocation5 + $0x50] sm:$0xff] %v1264
    %1796 = vst [vmem:[#allocation5 + $0x58] sm:$0xff] %v1368
    %1797 = vst [vmem:[#allocation5 + $0x60] sm:$0xff] %v1472
    %1798 = vst [vmem:[#allocation5 + $0x68] sm:$0xff] %v1576
    %1799 = vst [vmem:[#allocation5 + $0x70] sm:$0xff] %v1680
    %1800 = vst [vmem:[#allocation5 + $0x78] sm:$0xff] %v1784
    // Predicated region
    $region14: #{tpu_custom_call.1} parent=1 // pred_check
      _
    $region15: #{tpu_custom_call.1} parent=1 // pred_check_branch
      %1802 = sbr.rel (0) target = $region17
    $region16: #{tpu_custom_call.1} parent=1 // pred_region
      %s1804 = ssub.s32 2048, 2048
      %1805 = vsyncadd [#allocation4], %s1804
      %s1806 = sshll.u32 [#allocation5], 4
      %s1807 = int_to_ptr.vmem [resolvable:$true] %s1806
      %1812 = dma.vmem_to_hbm [thread:$0]  %s1807, 2048, %s2, [#allocation4], 128, 128, 8
    $region17: #{tpu_custom_call.1} parent=1 // pred_fallthru
      _
    // Predicated region
    $region18: #{tpu_custom_call.1} parent=1 // pred_check
      _
    $region19: #{tpu_custom_call.1} parent=1 // pred_check_branch
      %1814 = sbr.rel (0) target = $region21
    $region20: #{tpu_custom_call.1} parent=1 // pred_region
      %1815 = dma.done [#allocation4], 2048
    $region21: #{tpu_custom_call.1} parent=1 // pred_fallthru
      _
    %1816 = vsyncpa [#allocation3], 1
    %1817 = vsyncpa [#allocation4], 1

</llo_original>
